<compile_context>
chip_gen: v6e
topology: v6e:2x2x1
jax: 0.10.0
libtpu: 0.0.40
codegen_flags: <defaults>
</compile_context>

<pallas_src>
import jax
import jax.numpy as jnp
import numpy as np
from jax.experimental import pallas as pl
from jax.experimental.pallas import tpu as pltpu

IGNORE_INDEX = 255


def _round_up(x, m):
    return ((x + m - 1) // m) * m


def _interp_matrix(out_size, in_size, dtype=jnp.float32):
    """M (out, in) s.t. M @ x == 1-D linear interpolation with align_corners=True."""
    if in_size == 1:
        return jnp.ones((out_size, 1), dtype)
    if out_size == 1:
        coords = jnp.zeros((1,), jnp.float32)
    else:
        coords = jnp.arange(out_size, dtype=jnp.float32) * (in_size - 1) / (out_size - 1)
    lo = jnp.clip(jnp.floor(coords).astype(jnp.int32), 0, in_size - 2)
    frac = coords - lo.astype(jnp.float32)
    rows = jnp.arange(out_size)
    mat = jnp.zeros((out_size, in_size), jnp.float32)
    mat = mat.at[rows, lo].add(1.0 - frac)
    mat = mat.at[rows, lo + 1].add(frac)
    return mat.astype(dtype)


def _vmem_budget():
    """(vmem_limit_bytes, tile_working_set_budget) keyed to the TPU generation."""
    cap = 64 * 1024 * 1024                      # conservative fallback (v7x per-core VMEM)
    try:
        q = int(pltpu.get_tpu_info().vmem_capacity_bytes)
        if q > 0:
            cap = q
    except Exception:
        pass
    # Leave headroom for double-buffered input blocks + compiler temporaries:
    #   v7x (64 MiB)      -> limit 48 MiB, tile budget ~36 MiB
    #   v5e/v6e (128 MiB) -> limit 96 MiB, tile budget ~72 MiB
    limit = max(16 * 1024 * 1024, min(int(cap * 0.75), cap - (8 << 20)))
    return limit, int(limit * 0.75)


def _choose_tile_h(H, W, C, hp, wp, n_preds, mm_bytes, tile_budget):
    """Largest multiple-of-8 height tile whose working set fits the budget."""
    # VMEM that does not scale with TILE_H.
    fixed = (n_preds * C * hp * W * mm_bytes         # hoisted column-interp scratch
             + 2 * n_preds * C * hp * wp * mm_bytes  # double-buffered pred blocks
             + 2 * wp * W * mm_bytes)                # resident col-interp matrix
    avail = tile_budget - fixed
    # Per output row: target strip (2x, i32) + rh strip (2x, mm_dtype) + ~9 live
    # f32 (TILE_H, W) slabs.  Only ONE pred's slabs are live at a time (the pred
    # loop is sequential) and the online softmax keeps just a handful of slabs.
    per_row = 2 * W * 4 + 2 * hp * mm_bytes + 9 * W * 4
    cap_rows = max(8, avail // per_row)
    tile = min(512, cap_rows, _round_up(H, 8))
    return max(8, (int(tile) // 8) * 8)


def _make_ce_kernel(n_preds, weights, num_classes, lp_exp):
    weights = tuple(float(w) for w in weights)

    def kernel(tgt_ref, rh_ref, rw_ref, *rest):
        pred_refs = rest[:n_preds]
        loss_ref = rest[n_preds]
        cnt_ref = rest[n_preds + 1]
        col_ref = rest[n_preds + 2]

        C = num_classes
        hp, wp = pred_refs[0].shape[2], pred_refs[0].shape[3]
        W = rw_ref.shape[1]
        col_dtype = col_ref.dtype
        h = pl.program_id(1)

        # ---- once per batch element (h == 0) --------------------------------
        # Zero the per-batch accumulators and HOIST the column interpolation:
        # col[p] = pred[p] @ rw, kept in a VMEM scratch that stays resident
        # across all height strips of this batch element.
        @pl.when(h == 0)
        def _():
            loss_ref[...] = jnp.zeros_like(loss_ref)
            cnt_ref[...] = jnp.zeros_like(cnt_ref)
            rw = rw_ref[...]
            for p in range(n_preds):
                if hp % 8 == 0:
                    # One merged (C*hp, wp) x (wp, W) MXU matmul per pred
                    # (leading-dim reshape is layout-free when hp % 8 == 0).
                    pc = pred_refs[p][0].reshape(C * hp, wp)
                    col = jnp.dot(pc, rw, preferred_element_type=jnp.float32)
                    col_ref[p] = col.reshape(C, hp, W).astype(col_dtype)
                else:
                    # Safe fallback: one small matmul per class.
                    for c in range(C):
                        col_ref[p, c] = jnp.dot(
                            pred_refs[p][0, c], rw,
                            preferred_element_type=jnp.float32).astype(col_dtype)

        # ---- per height strip ------------------------------------------------
        rh = rh_ref[...]                        # (TILE_H, hp)   row-interp strip
        tgt = tgt_ref[0]                        # (TILE_H, W)    int32 labels
        valid = tgt != IGNORE_INDEX
        # Labels outside [0, C-1] that are not 255 give picked = 0 (loss =
        # logsumexp); PyTorch would raise.  Assumes clean inputs.
        tsafe = jnp.where(valid, tgt, 0)

        def _exp(x):
            if lp_exp:  # bf16 EUP path on v6e/v7x (~2x f32 rate); f32 accumulation.
                return jnp.exp(x.astype(jnp.bfloat16)).astype(jnp.float32)
            return jnp.exp(x)

        total = jnp.zeros((1, 1), jnp.float32)
        for p in range(n_preds):
            # Online (flash-style) softmax over classes: only ~5 (TILE_H, W) f32
            # slabs live at once, so TILE_H can be large.  Each class needs only
            # the cheap (TILE_H, hp) x (hp, W) row matmul against the hoisted
            # column scratch.
            ups = jnp.dot(rh, col_ref[p, 0], preferred_element_type=jnp.float32)
            m = ups
            esum = jnp.ones_like(ups)
            picked = jnp.where(tsafe == 0, ups, 0.0)
            for c in range(1, C):
                ups = jnp.dot(rh, col_ref[p, c], preferred_element_type=jnp.float32)
                m_new = jnp.maximum(m, ups)
                esum = esum * _exp(m - m_new) + _exp(ups - m_new)
                picked = picked + jnp.where(tsafe == c, ups, 0.0)
                m = m_new
            loss_px = jnp.where(valid, m + jnp.log(esum) - picked, 0.0)
            total = total + weights[p] * jnp.sum(loss_px, keepdims=True)

        # Per-batch accumulators, resident across the (arbitrary) height axis.
        loss_ref[...] += total[None]
        cnt_ref[...] += jnp.sum(valid.astype(jnp.float32), keepdims=True)[None]

    return kernel


def _dsn_loss(target, preds, weights, mm_dtype=jnp.bfloat16, max_tile_h=None):
    n_preds = len(preds)
    B, C, hp, wp = preds[0].shape
    _, H, W = target.shape
    target = target.astype(jnp.int32)
    # TODO(synk): could ship the target as uint8 to shrink the label DMA further.

    mm_dtype = np.dtype(mm_dtype)
    mm_bytes = mm_dtype.itemsize
    lp_exp = mm_dtype == np.dtype(jnp.bfloat16)

    preds = [p.astype(mm_dtype) for p in preds]
    rh = _interp_matrix(H, hp, mm_dtype)        # (H, hp)  row interpolation
    rw = _interp_matrix(W, wp, mm_dtype).T      # (wp, W)  column interpolation

    vmem_limit, tile_budget = _vmem_budget()
    tile_h = _choose_tile_h(H, W, C, hp, wp, n_preds, mm_bytes, tile_budget)
    if max_tile_h is not None:
        tile_h = max(8, min(tile_h, (int(max_tile_h) // 8) * 8))

    # Pad the height axis to a multiple of TILE_H: padded rows carry the ignore
    # label (0 loss, 0 count) and zero interpolation weights.
    H_pad = _round_up(H, tile_h)
    if H_pad != H:
        target = jnp.pad(target, ((0, 0), (0, H_pad - H), (0, 0)),
                         constant_values=IGNORE_INDEX)
        rh = jnp.pad(rh, ((0, H_pad - H), (0, 0)))
    n_h = H_pad // tile_h

    kernel = _make_ce_kernel(n_preds, weights, C, lp_exp)

    in_specs = [
        pl.BlockSpec((1, tile_h, W), lambda b, h: (b, h, 0)),      # target strip
        pl.BlockSpec((tile_h, hp), lambda b, h: (h, 0)),           # row-interp strip
        pl.BlockSpec((wp, W), lambda b, h: (0, 0)),                # col-interp (resident)
    ] + [
        pl.BlockSpec((1, C, hp, wp), lambda b, h: (b, 0, 0, 0))    # preds (resident over h)
        for _ in range(n_preds)
    ]
    out_specs = (pl.BlockSpec((1, 1, 1), lambda b, h: (b, 0, 0)),
                 pl.BlockSpec((1, 1, 1), lambda b, h: (b, 0, 0)))

    loss_part, cnt_part = pl.pallas_call(
        kernel,
        out_shape=(jax.ShapeDtypeStruct((B, 1, 1), jnp.float32),
                   jax.ShapeDtypeStruct((B, 1, 1), jnp.float32)),
        grid_spec=pltpu.PrefetchScalarGridSpec(
            num_scalar_prefetch=0,
            grid=(B, n_h),
            in_specs=in_specs,
            out_specs=out_specs,
            scratch_shapes=[pltpu.VMEM((n_preds, C, hp, W), mm_dtype)],
        ),
        compiler_params=pltpu.CompilerParams(
            # b can be split across v7x's two TensorCores; h must stay
            # sequential (it carries the accumulators and the h==0 hoist).
            dimension_semantics=("parallel", "arbitrary"),
            vmem_limit_bytes=vmem_limit,
        ),
    )(target, rh, rw, *preds)

    # Tiny final reduction / division in plain JAX.  All-pixels-ignored gives
    # 0/0 = NaN, matching PyTorch's CrossEntropyLoss(reduction='mean').
    return jnp.sum(loss_part) / jnp.sum(cnt_part)


def criterion_dsn(target, preds, mm_dtype=jnp.bfloat16):
    """Forward of CriterionDSN: loss1 + 0.4 * loss2 (or single loss if one pred)."""
    if len(preds) >= 2:
        return _dsn_loss(target, [preds[0], preds[1]], (1.0, 0.4), mm_dtype=mm_dtype)
    return _dsn_loss(target, [preds[0]], (1.0,), mm_dtype=mm_dtype)


def _ref_loss(target, pred):
    """Pure-JAX f32 reference for one pred (mirrors F.interpolate + CrossEntropyLoss)."""
    B, C, hp, wp = pred.shape
    H, W = target.shape[1], target.shape[2]
    rh = _interp_matrix(H, hp)
    rw = _interp_matrix(W, wp)
    up = jnp.einsum('Hh,bchw,Ww->bcHW', rh, pred.astype(jnp.float32), rw)
    logp = jax.nn.log_softmax(up, axis=1)
    valid = target != IGNORE_INDEX
    tsafe = jnp.where(valid, target, 0)
    picked = jnp.take_along_axis(logp, tsafe[:, None], axis=1)[:, 0]
    loss = -jnp.where(valid, picked, 0.0)
    return jnp.sum(loss) / jnp.sum(valid).astype(jnp.float32)


if __name__ == "__main__":
    key = jax.random.PRNGKey(0)
    k1, k2, k3, k4, k5, k6 = jax.random.split(key, 6)

    B, C, H, W = 2, 4, 16, 16      # target resolution
    hp, wp = 8, 8                  # prediction (pre-upsample) resolution

    target = jax.random.randint(k1, (B, H, W), 0, C, dtype=jnp.int32)
    ignore_mask = jax.random.bernoulli(k2, 0.1, (B, H, W))
    target = jnp.where(ignore_mask, IGNORE_INDEX, target).astype(jnp.int32)

    pred0 = jax.random.normal(k3, (B, C, hp, wp), dtype=jnp.float32)
    pred1 = jax.random.normal(k4, (B, C, hp, wp), dtype=jnp.float32)

    ref = _ref_loss(target, pred0) + 0.4 * _ref_loss(target, pred1)

    # 1) Exact-math validation (f32 matmuls / exp) against the pure-JAX reference.
    loss_f32 = jax.block_until_ready(
        criterion_dsn(target, [pred0, pred1], mm_dtype=jnp.float32))
    assert jnp.allclose(loss_f32, ref, rtol=1e-4, atol=1e-4), (loss_f32, ref)

    # 2) Multi-strip path (forced small TILE_H): exercises the per-b accumulation
    #    over the h axis and the once-per-b (h == 0) column-interp hoist.
    loss_strips = jax.block_until_ready(
        _dsn_loss(target, [pred0, pred1], (1.0, 0.4),
                  mm_dtype=jnp.float32, max_tile_h=8))
    assert jnp.allclose(loss_strips, ref, rtol=1e-4, atol=1e-4), (loss_strips, ref)

    # 3) Ragged H (padded with ignore labels inside the wrapper).
    H2, W2 = 12, 16
    target2 = jax.random.randint(k5, (B, H2, W2), 0, C, dtype=jnp.int32)
    target2 = jnp.where(jax.random.bernoulli(k6, 0.1, (B, H2, W2)),
                        IGNORE_INDEX, target2).astype(jnp.int32)
    ref2 = _ref_loss(target2, pred0) + 0.4 * _ref_loss(target2, pred1)
    loss_ragged = jax.block_until_ready(
        criterion_dsn(target2, [pred0, pred1], mm_dtype=jnp.float32))
    assert jnp.allclose(loss_ragged, ref2, rtol=1e-4, atol=1e-4), (loss_ragged, ref2)

    # 4) Default fast path: bf16 MXU matmuls + bf16 EUP exp (f32 accumulation).
    #    Looser tolerance covers the intentional bf16 precision trade-off.
    loss_bf16 = jax.block_until_ready(criterion_dsn(target, [pred0, pred1]))
    assert jnp.allclose(loss_bf16, ref, rtol=3e-2, atol=3e-2), (loss_bf16, ref)

    print("KERNEL_OK")
</pallas_src>

<mosaic_0001>
module attributes {stable_mosaic.version = 11 : i64} {
  func.func @kernel(%arg0: i32, %arg1: i32, %arg2: memref<1x16x16xi32, #tpu.memory_space<vmem>>, %arg3: memref<16x8xf32, #tpu.memory_space<vmem>>, %arg4: memref<8x16xf32, #tpu.memory_space<vmem>>, %arg5: memref<1x4x8x8xf32, #tpu.memory_space<vmem>>, %arg6: memref<1x4x8x8xf32, #tpu.memory_space<vmem>>, %arg7: memref<1x1x1xf32, #tpu.memory_space<vmem>>, %arg8: memref<1x1x1xf32, #tpu.memory_space<vmem>>, %arg9: memref<2x4x8x16xf32, #tpu.memory_space<vmem>>) attributes {dimension_semantics = [#tpu.dimension_semantics<parallel>, #tpu.dimension_semantics<arbitrary>], iteration_bounds = array<i64: 2, 1>, scalar_prefetch = 0 : i64, scratch_operands = 1 : i64, tpu.core_type = #tpu.core_type<tc>, window_params = [{transform_indices = @transform_0, window_bounds = array<i64: 1, 16, 16>}, {transform_indices = @transform_1, window_bounds = array<i64: 16, 8>}, {pipeline_mode = #tpu.pipeline_mode<synchronous>, transform_indices = @transform_2, window_bounds = array<i64: 8, 16>}, {transform_indices = @transform_3, window_bounds = array<i64: 1, 4, 8, 8>}, {transform_indices = @transform_4, window_bounds = array<i64: 1, 4, 8, 8>}, {transform_indices = @transform_5, window_bounds = array<i64: 1, 1, 1>}, {transform_indices = @transform_6, window_bounds = array<i64: 1, 1, 1>}]} {
    %c0_i32 = arith.constant 0 : i32
    %0 = arith.cmpi eq, %arg1, %c0_i32 : i32
    %1 = arith.extui %0 : i1 to i32
    %c0_i32_0 = arith.constant 0 : i32
    %2 = arith.cmpi ne, %1, %c0_i32_0 : i32
    scf.if %2 {
      %cst_77 = arith.constant 0.000000e+00 : f32
      %158 = vector.broadcast %cst_77 : f32 to vector<1x1x1xf32>
      %c0_78 = arith.constant 0 : index
      %c0_79 = arith.constant 0 : index
      %c0_80 = arith.constant 0 : index
      %159 = vector.load %arg7[%c0_78, %c0_79, %c0_80] : memref<1x1x1xf32, #tpu.memory_space<vmem>>, vector<1x1x1xf32>
      tpu.vector_store %arg7[%c0_78, %c0_79, %c0_80], %158 {strides = array<i32>} : memref<1x1x1xf32, #tpu.memory_space<vmem>>, vector<1x1x1xf32>,
      %cst_81 = arith.constant 0.000000e+00 : f32
      %160 = vector.broadcast %cst_81 : f32 to vector<1x1x1xf32>
      %c0_82 = arith.constant 0 : index
      %c0_83 = arith.constant 0 : index
      %c0_84 = arith.constant 0 : index
      %161 = vector.load %arg8[%c0_82, %c0_83, %c0_84] : memref<1x1x1xf32, #tpu.memory_space<vmem>>, vector<1x1x1xf32>
      tpu.vector_store %arg8[%c0_82, %c0_83, %c0_84], %160 {strides = array<i32>} : memref<1x1x1xf32, #tpu.memory_space<vmem>>, vector<1x1x1xf32>,
      %c0_85 = arith.constant 0 : index
      %c0_86 = arith.constant 0 : index
      %162 = vector.load %arg4[%c0_85, %c0_86] : memref<8x16xf32, #tpu.memory_space<vmem>>, vector<8x16xf32>
      %c0_87 = arith.constant 0 : index
      %c0_88 = arith.constant 0 : index
      %c0_89 = arith.constant 0 : index
      %c0_90 = arith.constant 0 : index
      %163 = vector.load %arg5[%c0_87, %c0_88, %c0_89, %c0_90] : memref<1x4x8x8xf32, #tpu.memory_space<vmem>>, vector<1x4x8x8xf32>
      %164 = vector.shape_cast %163 : vector<1x4x8x8xf32> to vector<4x8x8xf32>
      %165 = vector.shape_cast %164 : vector<4x8x8xf32> to vector<32x8xf32>
      %cst_91 = arith.constant dense<0.000000e+00> : vector<32x16xf32>
      %166 = tpu.matmul %165, %162, %cst_91 {dimension_numbers = #tpu.dot_dimension_numbers<[1], [0], [0], [1], [0, 0, 1, 1], [], []>} : vector<32x8xf32>, vector<8x16xf32>, vector<32x16xf32> -> vector<32x16xf32>
      %167 = vector.shape_cast %166 : vector<32x16xf32> to vector<4x8x16xf32>
      %c0_92 = arith.constant 0 : index
      %c0_93 = arith.constant 0 : index
      %c0_94 = arith.constant 0 : index
      %c0_95 = arith.constant 0 : index
      %168 = vector.load %arg9[%c0_92, %c0_93, %c0_94, %c0_95] : memref<2x4x8x16xf32, #tpu.memory_space<vmem>>, vector<1x4x8x16xf32>
      %169 = vector.shape_cast %168 : vector<1x4x8x16xf32> to vector<4x8x16xf32>
      %170 = vector.shape_cast %167 : vector<4x8x16xf32> to vector<1x4x8x16xf32>
      tpu.vector_store %arg9[%c0_92, %c0_93, %c0_94, %c0_95], %170 {strides = array<i32>} : memref<2x4x8x16xf32, #tpu.memory_space<vmem>>, vector<1x4x8x16xf32>,
      %c0_96 = arith.constant 0 : index
      %c0_97 = arith.constant 0 : index
      %c0_98 = arith.constant 0 : index
      %c0_99 = arith.constant 0 : index
      %171 = vector.load %arg6[%c0_96, %c0_97, %c0_98, %c0_99] : memref<1x4x8x8xf32, #tpu.memory_space<vmem>>, vector<1x4x8x8xf32>
      %172 = vector.shape_cast %171 : vector<1x4x8x8xf32> to vector<4x8x8xf32>
      %173 = vector.shape_cast %172 : vector<4x8x8xf32> to vector<32x8xf32>
      %cst_100 = arith.constant dense<0.000000e+00> : vector<32x16xf32>
      %174 = tpu.matmul %173, %162, %cst_100 {dimension_numbers = #tpu.dot_dimension_numbers<[1], [0], [0], [1], [0, 0, 1, 1], [], []>} : vector<32x8xf32>, vector<8x16xf32>, vector<32x16xf32> -> vector<32x16xf32>
      %175 = vector.shape_cast %174 : vector<32x16xf32> to vector<4x8x16xf32>
      %c1_101 = arith.constant 1 : index
      %c0_102 = arith.constant 0 : index
      %c0_103 = arith.constant 0 : index
      %c0_104 = arith.constant 0 : index
      %176 = vector.load %arg9[%c1_101, %c0_102, %c0_103, %c0_104] : memref<2x4x8x16xf32, #tpu.memory_space<vmem>>, vector<1x4x8x16xf32>
      %177 = vector.shape_cast %176 : vector<1x4x8x16xf32> to vector<4x8x16xf32>
      %178 = vector.shape_cast %175 : vector<4x8x16xf32> to vector<1x4x8x16xf32>
      tpu.vector_store %arg9[%c1_101, %c0_102, %c0_103, %c0_104], %178 {strides = array<i32>} : memref<2x4x8x16xf32, #tpu.memory_space<vmem>>, vector<1x4x8x16xf32>,
    } else {
    }
    %c0 = arith.constant 0 : index
    %c0_1 = arith.constant 0 : index
    %3 = vector.load %arg3[%c0, %c0_1] : memref<16x8xf32, #tpu.memory_space<vmem>>, vector<16x8xf32>
    %c0_2 = arith.constant 0 : index
    %c0_3 = arith.constant 0 : index
    %c0_4 = arith.constant 0 : index
    %4 = vector.load %arg2[%c0_2, %c0_3, %c0_4] : memref<1x16x16xi32, #tpu.memory_space<vmem>>, vector<1x16x16xi32>
    %5 = vector.shape_cast %4 : vector<1x16x16xi32> to vector<16x16xi32>
    %c255_i32 = arith.constant 255 : i32
    %6 = vector.broadcast %c255_i32 : i32 to vector<16x16xi32>
    %7 = arith.cmpi ne, %5, %6 : vector<16x16xi32>
    %c0_i32_5 = arith.constant 0 : i32
    %8 = vector.broadcast %c0_i32_5 : i32 to vector<16x16xi32>
    %9 = arith.select %7, %5, %8 : vector<16x16xi1>, vector<16x16xi32>
    %cst = arith.constant 0.000000e+00 : f32
    %10 = vector.broadcast %cst : f32 to vector<1x1xf32>
    %c0_6 = arith.constant 0 : index
    %c0_7 = arith.constant 0 : index
    %c0_8 = arith.constant 0 : index
    %c0_9 = arith.constant 0 : index
    %11 = vector.load %arg9[%c0_6, %c0_7, %c0_8, %c0_9] : memref<2x4x8x16xf32, #tpu.memory_space<vmem>>, vector<1x1x8x16xf32>
    %12 = vector.shape_cast %11 : vector<1x1x8x16xf32> to vector<8x16xf32>
    %cst_10 = arith.constant dense<0.000000e+00> : vector<16x16xf32>
    %13 = tpu.matmul %3, %12, %cst_10 {dimension_numbers = #tpu.dot_dimension_numbers<[1], [0], [0], [1], [0, 0, 1, 1], [], []>} : vector<16x8xf32>, vector<8x16xf32>, vector<16x16xf32> -> vector<16x16xf32>
    %cst_11 = arith.constant 1.000000e+00 : f32
    %14 = vector.broadcast %cst_11 : f32 to vector<16x16xf32>
    %c0_i32_12 = arith.constant 0 : i32
    %15 = vector.broadcast %c0_i32_12 : i32 to vector<16x16xi32>
    %16 = arith.cmpi eq, %9, %15 : vector<16x16xi32>
    %cst_13 = arith.constant 0.000000e+00 : f32
    %17 = vector.broadcast %cst_13 : f32 to vector<16x16xf32>
    %18 = arith.select %16, %13, %17 : vector<16x16xi1>, vector<16x16xf32>
    %c0_14 = arith.constant 0 : index
    %c1 = arith.constant 1 : index
    %c0_15 = arith.constant 0 : index
    %c0_16 = arith.constant 0 : index
    %19 = vector.load %arg9[%c0_14, %c1, %c0_15, %c0_16] : memref<2x4x8x16xf32, #tpu.memory_space<vmem>>, vector<1x1x8x16xf32>
    %20 = vector.shape_cast %19 : vector<1x1x8x16xf32> to vector<8x16xf32>
    %cst_17 = arith.constant dense<0.000000e+00> : vector<16x16xf32>
    %21 = tpu.matmul %3, %20, %cst_17 {dimension_numbers = #tpu.dot_dimension_numbers<[1], [0], [0], [1], [0, 0, 1, 1], [], []>} : vector<16x8xf32>, vector<8x16xf32>, vector<16x16xf32> -> vector<16x16xf32>
    %22 = arith.maximumf %13, %21 : vector<16x16xf32>
    %23 = arith.subf %13, %22 : vector<16x16xf32>
    %24 = math.exp %23 : vector<16x16xf32>
    %25 = arith.mulf %14, %24 : vector<16x16xf32>
    %26 = arith.subf %21, %22 : vector<16x16xf32>
    %27 = math.exp %26 : vector<16x16xf32>
    %28 = arith.addf %25, %27 : vector<16x16xf32>
    %c1_i32 = arith.constant 1 : i32
    %29 = vector.broadcast %c1_i32 : i32 to vector<16x16xi32>
    %30 = arith.cmpi eq, %9, %29 : vector<16x16xi32>
    %cst_18 = arith.constant 0.000000e+00 : f32
    %31 = vector.broadcast %cst_18 : f32 to vector<16x16xf32>
    %32 = arith.select %30, %21, %31 : vector<16x16xi1>, vector<16x16xf32>
    %33 = arith.addf %18, %32 : vector<16x16xf32>
    %c0_19 = arith.constant 0 : index
    %c2 = arith.constant 2 : index
    %c0_20 = arith.constant 0 : index
    %c0_21 = arith.constant 0 : index
    %34 = vector.load %arg9[%c0_19, %c2, %c0_20, %c0_21] : memref<2x4x8x16xf32, #tpu.memory_space<vmem>>, vector<1x1x8x16xf32>
    %35 = vector.shape_cast %34 : vector<1x1x8x16xf32> to vector<8x16xf32>
    %cst_22 = arith.constant dense<0.000000e+00> : vector<16x16xf32>
    %36 = tpu.matmul %3, %35, %cst_22 {dimension_numbers = #tpu.dot_dimension_numbers<[1], [0], [0], [1], [0, 0, 1, 1], [], []>} : vector<16x8xf32>, vector<8x16xf32>, vector<16x16xf32> -> vector<16x16xf32>
    %37 = arith.maximumf %22, %36 : vector<16x16xf32>
    %38 = arith.subf %22, %37 : vector<16x16xf32>
    %39 = math.exp %38 : vector<16x16xf32>
    %40 = arith.mulf %28, %39 : vector<16x16xf32>
    %41 = arith.subf %36, %37 : vector<16x16xf32>
    %42 = math.exp %41 : vector<16x16xf32>
    %43 = arith.addf %40, %42 : vector<16x16xf32>
    %c2_i32 = arith.constant 2 : i32
    %44 = vector.broadcast %c2_i32 : i32 to vector<16x16xi32>
    %45 = arith.cmpi eq, %9, %44 : vector<16x16xi32>
    %cst_23 = arith.constant 0.000000e+00 : f32
    %46 = vector.broadcast %cst_23 : f32 to vector<16x16xf32>
    %47 = arith.select %45, %36, %46 : vector<16x16xi1>, vector<16x16xf32>
    %48 = arith.addf %33, %47 : vector<16x16xf32>
    %c0_24 = arith.constant 0 : index
    %c3 = arith.constant 3 : index
    %c0_25 = arith.constant 0 : index
    %c0_26 = arith.constant 0 : index
    %49 = vector.load %arg9[%c0_24, %c3, %c0_25, %c0_26] : memref<2x4x8x16xf32, #tpu.memory_space<vmem>>, vector<1x1x8x16xf32>
    %50 = vector.shape_cast %49 : vector<1x1x8x16xf32> to vector<8x16xf32>
    %cst_27 = arith.constant dense<0.000000e+00> : vector<16x16xf32>
    %51 = tpu.matmul %3, %50, %cst_27 {dimension_numbers = #tpu.dot_dimension_numbers<[1], [0], [0], [1], [0, 0, 1, 1], [], []>} : vector<16x8xf32>, vector<8x16xf32>, vector<16x16xf32> -> vector<16x16xf32>
    %52 = arith.maximumf %37, %51 : vector<16x16xf32>
    %53 = arith.subf %37, %52 : vector<16x16xf32>
    %54 = math.exp %53 : vector<16x16xf32>
    %55 = arith.mulf %43, %54 : vector<16x16xf32>
    %56 = arith.subf %51, %52 : vector<16x16xf32>
    %57 = math.exp %56 : vector<16x16xf32>
    %58 = arith.addf %55, %57 : vector<16x16xf32>
    %c3_i32 = arith.constant 3 : i32
    %59 = vector.broadcast %c3_i32 : i32 to vector<16x16xi32>
    %60 = arith.cmpi eq, %9, %59 : vector<16x16xi32>
    %cst_28 = arith.constant 0.000000e+00 : f32
    %61 = vector.broadcast %cst_28 : f32 to vector<16x16xf32>
    %62 = arith.select %60, %51, %61 : vector<16x16xi1>, vector<16x16xf32>
    %63 = arith.addf %48, %62 : vector<16x16xf32>
    %64 = math.log %58 : vector<16x16xf32>
    %65 = arith.addf %52, %64 : vector<16x16xf32>
    %66 = arith.subf %65, %63 : vector<16x16xf32>
    %cst_29 = arith.constant 0.000000e+00 : f32
    %67 = vector.broadcast %cst_29 : f32 to vector<16x16xf32>
    %68 = arith.select %7, %66, %67 : vector<16x16xi1>, vector<16x16xf32>
    %69 = vector.shape_cast %68 : vector<16x16xf32> to vector<1x16x16xf32>
    %cst_30 = arith.constant dense<0.000000e+00> : vector<1xf32>
    %70 = vector.multi_reduction <add>, %69, %cst_30 [1, 2] : vector<1x16x16xf32> to vector<1xf32>
    %71 = vector.shape_cast %70 : vector<1xf32> to vector<1x1x1xf32>
    %72 = vector.extract %71[0, 0, 0] : f32 from vector<1x1x1xf32>
    %73 = vector.broadcast %72 : f32 to vector<1x1xf32>
    %cst_31 = arith.constant 1.000000e+00 : f32
    %74 = vector.broadcast %cst_31 : f32 to vector<1x1xf32>
    %75 = arith.mulf %74, %73 : vector<1x1xf32>
    %76 = arith.addf %10, %75 : vector<1x1xf32>
    %c1_32 = arith.constant 1 : index
    %c0_33 = arith.constant 0 : index
    %c0_34 = arith.constant 0 : index
    %c0_35 = arith.constant 0 : index
    %77 = vector.load %arg9[%c1_32, %c0_33, %c0_34, %c0_35] : memref<2x4x8x16xf32, #tpu.memory_space<vmem>>, vector<1x1x8x16xf32>
    %78 = vector.shape_cast %77 : vector<1x1x8x16xf32> to vector<8x16xf32>
    %cst_36 = arith.constant dense<0.000000e+00> : vector<16x16xf32>
    %79 = tpu.matmul %3, %78, %cst_36 {dimension_numbers = #tpu.dot_dimension_numbers<[1], [0], [0], [1], [0, 0, 1, 1], [], []>} : vector<16x8xf32>, vector<8x16xf32>, vector<16x16xf32> -> vector<16x16xf32>
    %cst_37 = arith.constant 1.000000e+00 : f32
    %80 = vector.broadcast %cst_37 : f32 to vector<16x16xf32>
    %c0_i32_38 = arith.constant 0 : i32
    %81 = vector.broadcast %c0_i32_38 : i32 to vector<16x16xi32>
    %82 = arith.cmpi eq, %9, %81 : vector<16x16xi32>
    %cst_39 = arith.constant 0.000000e+00 : f32
    %83 = vector.broadcast %cst_39 : f32 to vector<16x16xf32>
    %84 = arith.select %82, %79, %83 : vector<16x16xi1>, vector<16x16xf32>
    %c1_40 = arith.constant 1 : index
    %c1_41 = arith.constant 1 : index
    %c0_42 = arith.constant 0 : index
    %c0_43 = arith.constant 0 : index
    %85 = vector.load %arg9[%c1_40, %c1_41, %c0_42, %c0_43] : memref<2x4x8x16xf32, #tpu.memory_space<vmem>>, vector<1x1x8x16xf32>
    %86 = vector.shape_cast %85 : vector<1x1x8x16xf32> to vector<8x16xf32>
    %cst_44 = arith.constant dense<0.000000e+00> : vector<16x16xf32>
    %87 = tpu.matmul %3, %86, %cst_44 {dimension_numbers = #tpu.dot_dimension_numbers<[1], [0], [0], [1], [0, 0, 1, 1], [], []>} : vector<16x8xf32>, vector<8x16xf32>, vector<16x16xf32> -> vector<16x16xf32>
    %88 = arith.maximumf %79, %87 : vector<16x16xf32>
    %89 = arith.subf %79, %88 : vector<16x16xf32>
    %90 = math.exp %89 : vector<16x16xf32>
    %91 = arith.mulf %80, %90 : vector<16x16xf32>
    %92 = arith.subf %87, %88 : vector<16x16xf32>
    %93 = math.exp %92 : vector<16x16xf32>
    %94 = arith.addf %91, %93 : vector<16x16xf32>
    %c1_i32_45 = arith.constant 1 : i32
    %95 = vector.broadcast %c1_i32_45 : i32 to vector<16x16xi32>
    %96 = arith.cmpi eq, %9, %95 : vector<16x16xi32>
    %cst_46 = arith.constant 0.000000e+00 : f32
    %97 = vector.broadcast %cst_46 : f32 to vector<16x16xf32>
    %98 = arith.select %96, %87, %97 : vector<16x16xi1>, vector<16x16xf32>
    %99 = arith.addf %84, %98 : vector<16x16xf32>
    %c1_47 = arith.constant 1 : index
    %c2_48 = arith.constant 2 : index
    %c0_49 = arith.constant 0 : index
    %c0_50 = arith.constant 0 : index
    %100 = vector.load %arg9[%c1_47, %c2_48, %c0_49, %c0_50] : memref<2x4x8x16xf32, #tpu.memory_space<vmem>>, vector<1x1x8x16xf32>
    %101 = vector.shape_cast %100 : vector<1x1x8x16xf32> to vector<8x16xf32>
    %cst_51 = arith.constant dense<0.000000e+00> : vector<16x16xf32>
    %102 = tpu.matmul %3, %101, %cst_51 {dimension_numbers = #tpu.dot_dimension_numbers<[1], [0], [0], [1], [0, 0, 1, 1], [], []>} : vector<16x8xf32>, vector<8x16xf32>, vector<16x16xf32> -> vector<16x16xf32>
    %103 = arith.maximumf %88, %102 : vector<16x16xf32>
    %104 = arith.subf %88, %103 : vector<16x16xf32>
    %105 = math.exp %104 : vector<16x16xf32>
    %106 = arith.mulf %94, %105 : vector<16x16xf32>
    %107 = arith.subf %102, %103 : vector<16x16xf32>
    %108 = math.exp %107 : vector<16x16xf32>
    %109 = arith.addf %106, %108 : vector<16x16xf32>
    %c2_i32_52 = arith.constant 2 : i32
    %110 = vector.broadcast %c2_i32_52 : i32 to vector<16x16xi32>
    %111 = arith.cmpi eq, %9, %110 : vector<16x16xi32>
    %cst_53 = arith.constant 0.000000e+00 : f32
    %112 = vector.broadcast %cst_53 : f32 to vector<16x16xf32>
    %113 = arith.select %111, %102, %112 : vector<16x16xi1>, vector<16x16xf32>
    %114 = arith.addf %99, %113 : vector<16x16xf32>
    %c1_54 = arith.constant 1 : index
    %c3_55 = arith.constant 3 : index
    %c0_56 = arith.constant 0 : index
    %c0_57 = arith.constant 0 : index
    %115 = vector.load %arg9[%c1_54, %c3_55, %c0_56, %c0_57] : memref<2x4x8x16xf32, #tpu.memory_space<vmem>>, vector<1x1x8x16xf32>
    %116 = vector.shape_cast %115 : vector<1x1x8x16xf32> to vector<8x16xf32>
    %cst_58 = arith.constant dense<0.000000e+00> : vector<16x16xf32>
    %117 = tpu.matmul %3, %116, %cst_58 {dimension_numbers = #tpu.dot_dimension_numbers<[1], [0], [0], [1], [0, 0, 1, 1], [], []>} : vector<16x8xf32>, vector<8x16xf32>, vector<16x16xf32> -> vector<16x16xf32>
    %118 = arith.maximumf %103, %117 : vector<16x16xf32>
    %119 = arith.subf %103, %118 : vector<16x16xf32>
    %120 = math.exp %119 : vector<16x16xf32>
    %121 = arith.mulf %109, %120 : vector<16x16xf32>
    %122 = arith.subf %117, %118 : vector<16x16xf32>
    %123 = math.exp %122 : vector<16x16xf32>
    %124 = arith.addf %121, %123 : vector<16x16xf32>
    %c3_i32_59 = arith.constant 3 : i32
    %125 = vector.broadcast %c3_i32_59 : i32 to vector<16x16xi32>
    %126 = arith.cmpi eq, %9, %125 : vector<16x16xi32>
    %cst_60 = arith.constant 0.000000e+00 : f32
    %127 = vector.broadcast %cst_60 : f32 to vector<16x16xf32>
    %128 = arith.select %126, %117, %127 : vector<16x16xi1>, vector<16x16xf32>
    %129 = arith.addf %114, %128 : vector<16x16xf32>
    %130 = math.log %124 : vector<16x16xf32>
    %131 = arith.addf %118, %130 : vector<16x16xf32>
    %132 = arith.subf %131, %129 : vector<16x16xf32>
    %cst_61 = arith.constant 0.000000e+00 : f32
    %133 = vector.broadcast %cst_61 : f32 to vector<16x16xf32>
    %134 = arith.select %7, %132, %133 : vector<16x16xi1>, vector<16x16xf32>
    %135 = vector.shape_cast %134 : vector<16x16xf32> to vector<1x16x16xf32>
    %cst_62 = arith.constant dense<0.000000e+00> : vector<1xf32>
    %136 = vector.multi_reduction <add>, %135, %cst_62 [1, 2] : vector<1x16x16xf32> to vector<1xf32>
    %137 = vector.shape_cast %136 : vector<1xf32> to vector<1x1x1xf32>
    %138 = vector.extract %137[0, 0, 0] : f32 from vector<1x1x1xf32>
    %139 = vector.broadcast %138 : f32 to vector<1x1xf32>
    %cst_63 = arith.constant 4.000000e-01 : f32
    %140 = vector.broadcast %cst_63 : f32 to vector<1x1xf32>
    %141 = arith.mulf %140, %139 : vector<1x1xf32>
    %142 = arith.addf %76, %141 : vector<1x1xf32>
    %c0_64 = arith.constant 0 : index
    %c0_65 = arith.constant 0 : index
    %c0_66 = arith.constant 0 : index
    %143 = vector.load %arg7[%c0_64, %c0_65, %c0_66] : memref<1x1x1xf32, #tpu.memory_space<vmem>>, vector<1x1x1xf32>
    %144 = vector.shape_cast %142 : vector<1x1xf32> to vector<1x1x1xf32>
    %145 = arith.addf %143, %144 : vector<1x1x1xf32>
    %c0_67 = arith.constant 0 : index
    %c0_68 = arith.constant 0 : index
    %c0_69 = arith.constant 0 : index
    %146 = vector.load %arg7[%c0_67, %c0_68, %c0_69] : memref<1x1x1xf32, #tpu.memory_space<vmem>>, vector<1x1x1xf32>
    tpu.vector_store %arg7[%c0_67, %c0_68, %c0_69], %145 {strides = array<i32>} : memref<1x1x1xf32, #tpu.memory_space<vmem>>, vector<1x1x1xf32>,
    %c0_70 = arith.constant 0 : index
    %c0_71 = arith.constant 0 : index
    %c0_72 = arith.constant 0 : index
    %147 = vector.load %arg8[%c0_70, %c0_71, %c0_72] : memref<1x1x1xf32, #tpu.memory_space<vmem>>, vector<1x1x1xf32>
    %148 = arith.extui %7 : vector<16x16xi1> to vector<16x16xi32>
    %149 = arith.sitofp %148 : vector<16x16xi32> to vector<16x16xf32>
    %150 = vector.shape_cast %149 : vector<16x16xf32> to vector<1x16x16xf32>
    %cst_73 = arith.constant dense<0.000000e+00> : vector<1xf32>
    %151 = vector.multi_reduction <add>, %150, %cst_73 [1, 2] : vector<1x16x16xf32> to vector<1xf32>
    %152 = vector.shape_cast %151 : vector<1xf32> to vector<1x1x1xf32>
    %153 = vector.extract %152[0, 0, 0] : f32 from vector<1x1x1xf32>
    %154 = vector.broadcast %153 : f32 to vector<1x1xf32>
    %155 = vector.shape_cast %154 : vector<1x1xf32> to vector<1x1x1xf32>
    %156 = arith.addf %147, %155 : vector<1x1x1xf32>
    %c0_74 = arith.constant 0 : index
    %c0_75 = arith.constant 0 : index
    %c0_76 = arith.constant 0 : index
    %157 = vector.load %arg8[%c0_74, %c0_75, %c0_76] : memref<1x1x1xf32, #tpu.memory_space<vmem>>, vector<1x1x1xf32>
    tpu.vector_store %arg8[%c0_74, %c0_75, %c0_76], %156 {strides = array<i32>} : memref<1x1x1xf32, #tpu.memory_space<vmem>>, vector<1x1x1xf32>,
    return
  }
  func.func @transform_0(%arg0: i32, %arg1: i32) -> (i32, i32, i32) {
    %c0_i32 = arith.constant 0 : i32
    %c0_i32_0 = arith.constant 0 : i32
    return %arg0, %arg1, %c0_i32 : i32, i32, i32
  }
  func.func @transform_1(%arg0: i32, %arg1: i32) -> (i32, i32) {
    %c0_i32 = arith.constant 0 : i32
    %c0_i32_0 = arith.constant 0 : i32
    return %arg1, %c0_i32 : i32, i32
  }
  func.func @transform_2(%arg0: i32, %arg1: i32) -> (i32, i32) {
    %c0_i32 = arith.constant 0 : i32
    %c0_i32_0 = arith.constant 0 : i32
    %c0_i32_1 = arith.constant 0 : i32
    return %c0_i32, %c0_i32_0 : i32, i32
  }
  func.func @transform_3(%arg0: i32, %arg1: i32) -> (i32, i32, i32, i32) {
    %c0_i32 = arith.constant 0 : i32
    %c0_i32_0 = arith.constant 0 : i32
    %c0_i32_1 = arith.constant 0 : i32
    %c0_i32_2 = arith.constant 0 : i32
    return %arg0, %c0_i32, %c0_i32_0, %c0_i32_1 : i32, i32, i32, i32
  }
  func.func @transform_4(%arg0: i32, %arg1: i32) -> (i32, i32, i32, i32) {
    %c0_i32 = arith.constant 0 : i32
    %c0_i32_0 = arith.constant 0 : i32
    %c0_i32_1 = arith.constant 0 : i32
    %c0_i32_2 = arith.constant 0 : i32
    return %arg0, %c0_i32, %c0_i32_0, %c0_i32_1 : i32, i32, i32, i32
  }
  func.func @transform_5(%arg0: i32, %arg1: i32) -> (i32, i32, i32) {
    %c0_i32 = arith.constant 0 : i32
    %c0_i32_0 = arith.constant 0 : i32
    %c0_i32_1 = arith.constant 0 : i32
    return %arg0, %c0_i32, %c0_i32_0 : i32, i32, i32
  }
  func.func @transform_6(%arg0: i32, %arg1: i32) -> (i32, i32, i32) {
    %c0_i32 = arith.constant 0 : i32
    %c0_i32_0 = arith.constant 0 : i32
    %c0_i32_1 = arith.constant 0 : i32
    return %arg0, %c0_i32, %c0_i32_0 : i32, i32, i32
  }
}

</mosaic_0001>

<llo_original>
// kernel: tpu_custom_call.1
$region0: #{tpu_custom_call.1}
  #allocation0 [shape = 'u32[]', space=smem, size = 0x4, offset = 0x4, fixed_abs, tag = 'smem constant byte address 0x4 - core index']
  #allocation1 [shape = 'u32[144,128]{1,0:T(1,128)}', space=vmem, size = 0x12000, scoped, tag = 'internal scratch']
  #allocation2 [shape = 'f32[2,4,8,16]{3,2,1,0:T(8,128)}', space=vmem, size = 0x8000, scoped, tag = 'scratch operand']
  %s0 = inlined_call_operand.hbm [shape: s32[2,16,16], index: 0, kind: input, shape index: {}]
  %s1 = inlined_call_operand.vmem [shape: f32[16,8], index: 1, kind: input, shape index: {}]
  %s2 = inlined_call_operand.vmem [shape: f32[8,16], index: 2, kind: input, shape index: {}]
  %s3 = inlined_call_operand.hbm [shape: f32[2,4,8,8], index: 3, kind: input, shape index: {}]
  %s4 = inlined_call_operand.hbm [shape: f32[2,4,8,8], index: 4, kind: input, shape index: {}]
  %s5 = inlined_call_operand.vmem [shape: f32[2,1,1], index: 5, kind: output, shape index: {0}]
  %s6 = inlined_call_operand.vmem [shape: f32[2,1,1], index: 6, kind: output, shape index: {1}]
  %7 = xla_tuple %s5, %s6
  %s8 = sld [smem:[#allocation0]]
  $region77: #{tpu_custom_call.1} parent=0
    _
  %s10 = ssub.s32 1, %s8
  %s11 = scalar_select 0, %s10, %s8
  $region1: #{tpu_custom_call.1} parent=0
    #allocation3 [shape = 'u8[16384]{0}', space=vmem, size = 0x4000, scoped, tag = 'input window, operand 0']
    #allocation4 [shape = 's32[2]{0}', space=sflag, size = 0x8, scoped, tag = 'scoped memory for tpu_custom_call.1']
    #allocation5 [shape = 'u8[32768]{0}', space=vmem, size = 0x8000, scoped, tag = 'input window, operand 3']
    #allocation6 [shape = 's32[2]{0}', space=sflag, size = 0x8, scoped, tag = 'scoped memory for tpu_custom_call.1']
    #allocation7 [shape = 'u8[32768]{0}', space=vmem, size = 0x8000, scoped, tag = 'input window, operand 4']
    %12 = vsyncpa [#allocation4], 0
    %s13 = scalar_lea.sflag [#allocation4], 1
    %14 = vsyncpa %s13, 0
    %15 = vsyncpa [#allocation6], 0
    %s16 = scalar_lea.sflag [#allocation6], 1
    %17 = vsyncpa %s16, 0
    loop: start=0, step=1, limit=4
    $region2: #{tpu_custom_call.1} parent=1 // loop_pre_header
      _
    $region3: #{tpu_custom_call.1} parent=1 // loop_header
      %s19 = sphi 0, %s23
      %p20 = scmp.ge.s32.totalorder %s19, 4
      %s26 = sphi 0, %s38
      %s27 = sphi 0, %s34
      %s28 = sphi 0, %s26
      %s29 = sphi 0, %s27
      %s30 = sphi 0, %s28
      %s31 = sphi 0, %s29
      %s43 = sphi 0, %s45
      %s46 = sphi 0, %s43
      %s47 = sphi 0, %s46
      %s63 = sphi 0, %s47
      %s69 = sphi 0, %s71
      %s72 = sphi 0, %s69
      %s73 = sphi 0, %s72
      %s89 = sphi 0, %s73
      %s93 = sphi 0, %s93
      %s95 = sphi 0, %s93
      %s96 = sphi 0, %s95
      %s110 = sphi 0, %s96
      %s116 = sphi 0, %s118
      %s119 = sphi 0, %s116
      %s120 = sphi 0, %s119
      %s136 = sphi 0, %s120
      %s142 = sphi 0, %s144
      %s145 = sphi 0, %s142
      %s146 = sphi 0, %s145
      %s162 = sphi 0, %s146
      %s168 = sphi 0, %s170
      %s171 = sphi 0, %s168
      %s172 = sphi 0, %s171
      %s188 = sphi 0, %s172
      %s194 = sphi 0, %s196
      %s197 = sphi 0, %s194
      %s198 = sphi 0, %s197
      %s214 = sphi 0, %s198
    $region4: #{tpu_custom_call.1} parent=1 // loop_header_branch
      %22 = sbr.rel (%p20) target = $region8
    $region5: #{tpu_custom_call.1} parent=1 // loop_body
      %s24 = ssub.s32 %s19, 1
      %s25 = ssub.s32 %s19, 2
      %s32 = sadd.s32 1, %s27
      %p33 = scmp.ge.s32.totalorder %s32, 1
      %s34 = scalar_select %p33, 0, %s32
      %s35 = sadd.s32 1, %s26
      %s36 = scalar_select %p33, %s35, %s26
      %p37 = scmp.ge.s32.totalorder %s36, 2
      %s38 = scalar_select %p37, 0, %s36
      %s39 = ssub.s32 %s26, %s38
      %s40 = ssub.s32 %s27, %s34
      %s41 = sor.u32 %s39, %s40
      %p42 = scmp.eq.s32.totalorder %s41, 0
      %s44 = sadd.s32 %s43, 1
      %s45 = scalar_select %p42, %s43, %s44
      %p48 = pneg %p42
      %p49 = scmp.eq.s32.totalorder %s19, 1
      %p50 = por %p48, %p49
      %p51 = scmp.ne.s32.totalorder %s43, %s46
      %p52 = scmp.eq.s32.totalorder %s19, 0
      %p53 = por %p51, %p52
      %p54 = scmp.ne.s32.totalorder %s43, %s46
      %p55 = scmp.eq.s32.totalorder %s24, 1
      %p56 = por %p54, %p55
      %p57 = scmp.ne.s32.totalorder %s46, %s47
      %p58 = scmp.eq.s32.totalorder %s24, 0
      %p59 = por %p57, %p58
      %p60 = scmp.ne.s32.totalorder %s46, %s47
      %p61 = scmp.eq.s32.totalorder %s25, 1
      %p62 = por %p60, %p61
      %p64 = scmp.ne.s32.totalorder %s47, %s63
      %p65 = scmp.eq.s32.totalorder %s25, 0
      %p66 = por %p64, %p65
      %s67 = ssub.s32 %s27, %s34
      %p68 = scmp.eq.s32.totalorder %s67, 0
      %s70 = sadd.s32 %s69, 1
      %s71 = scalar_select %p68, %s69, %s70
      %p74 = pneg %p68
      %p75 = scmp.eq.s32.totalorder %s19, 1
      %p76 = por %p74, %p75
      %p77 = scmp.ne.s32.totalorder %s69, %s72
      %p78 = scmp.eq.s32.totalorder %s19, 0
      %p79 = por %p77, %p78
      %p80 = scmp.ne.s32.totalorder %s69, %s72
      %p81 = scmp.eq.s32.totalorder %s24, 1
      %p82 = por %p80, %p81
      %p83 = scmp.ne.s32.totalorder %s72, %s73
      %p84 = scmp.eq.s32.totalorder %s24, 0
      %p85 = por %p83, %p84
      %p86 = scmp.ne.s32.totalorder %s72, %s73
      %p87 = scmp.eq.s32.totalorder %s25, 1
      %p88 = por %p86, %p87
      %p90 = scmp.ne.s32.totalorder %s73, %s89
      %p91 = scmp.eq.s32.totalorder %s25, 0
      %p92 = por %p90, %p91
      %s94 = sadd.s32 %s93, 1
      %p97 = scmp.eq.s32.totalorder %s19, 1
      %p98 = scmp.ne.s32.totalorder %s93, %s95
      %p99 = scmp.eq.s32.totalorder %s19, 0
      %p100 = por %p98, %p99
      %p101 = scmp.ne.s32.totalorder %s93, %s95
      %p102 = scmp.eq.s32.totalorder %s24, 1
      %p103 = por %p101, %p102
      %p104 = scmp.ne.s32.totalorder %s95, %s96
      %p105 = scmp.eq.s32.totalorder %s24, 0
      %p106 = por %p104, %p105
      %p107 = scmp.ne.s32.totalorder %s95, %s96
      %p108 = scmp.eq.s32.totalorder %s25, 1
      %p109 = por %p107, %p108
      %p111 = scmp.ne.s32.totalorder %s96, %s110
      %p112 = scmp.eq.s32.totalorder %s25, 0
      %p113 = por %p111, %p112
      %s114 = ssub.s32 %s26, %s38
      %p115 = scmp.eq.s32.totalorder %s114, 0
      %s117 = sadd.s32 %s116, 1
      %s118 = scalar_select %p115, %s116, %s117
      %p121 = pneg %p115
      %p122 = scmp.eq.s32.totalorder %s19, 1
      %p123 = por %p121, %p122
      %p124 = scmp.ne.s32.totalorder %s116, %s119
      %p125 = scmp.eq.s32.totalorder %s19, 0
      %p126 = por %p124, %p125
      %p127 = scmp.ne.s32.totalorder %s116, %s119
      %p128 = scmp.eq.s32.totalorder %s24, 1
      %p129 = por %p127, %p128
      %p130 = scmp.ne.s32.totalorder %s119, %s120
      %p131 = scmp.eq.s32.totalorder %s24, 0
      %p132 = por %p130, %p131
      %p133 = scmp.ne.s32.totalorder %s119, %s120
      %p134 = scmp.eq.s32.totalorder %s25, 1
      %p135 = por %p133, %p134
      %p137 = scmp.ne.s32.totalorder %s120, %s136
      %p138 = scmp.eq.s32.totalorder %s25, 0
      %p139 = por %p137, %p138
      %s140 = ssub.s32 %s26, %s38
      %p141 = scmp.eq.s32.totalorder %s140, 0
      %s143 = sadd.s32 %s142, 1
      %s144 = scalar_select %p141, %s142, %s143
      %p147 = pneg %p141
      %p148 = scmp.eq.s32.totalorder %s19, 1
      %p149 = por %p147, %p148
      %p150 = scmp.ne.s32.totalorder %s142, %s145
      %p151 = scmp.eq.s32.totalorder %s19, 0
      %p152 = por %p150, %p151
      %p153 = scmp.ne.s32.totalorder %s142, %s145
      %p154 = scmp.eq.s32.totalorder %s24, 1
      %p155 = por %p153, %p154
      %p156 = scmp.ne.s32.totalorder %s145, %s146
      %p157 = scmp.eq.s32.totalorder %s24, 0
      %p158 = por %p156, %p157
      %p159 = scmp.ne.s32.totalorder %s145, %s146
      %p160 = scmp.eq.s32.totalorder %s25, 1
      %p161 = por %p159, %p160
      %p163 = scmp.ne.s32.totalorder %s146, %s162
      %p164 = scmp.eq.s32.totalorder %s25, 0
      %p165 = por %p163, %p164
      %s166 = ssub.s32 %s26, %s38
      %p167 = scmp.eq.s32.totalorder %s166, 0
      %s169 = sadd.s32 %s168, 1
      %s170 = scalar_select %p167, %s168, %s169
      %p173 = pneg %p167
      %p174 = scmp.eq.s32.totalorder %s19, 1
      %p175 = por %p173, %p174
      %p176 = scmp.ne.s32.totalorder %s168, %s171
      %p177 = scmp.eq.s32.totalorder %s19, 0
      %p178 = por %p176, %p177
      %p179 = scmp.ne.s32.totalorder %s168, %s171
      %p180 = scmp.eq.s32.totalorder %s24, 1
      %p181 = por %p179, %p180
      %p182 = scmp.ne.s32.totalorder %s171, %s172
      %p183 = scmp.eq.s32.totalorder %s24, 0
      %p184 = por %p182, %p183
      %p185 = scmp.ne.s32.totalorder %s171, %s172
      %p186 = scmp.eq.s32.totalorder %s25, 1
      %p187 = por %p185, %p186
      %p189 = scmp.ne.s32.totalorder %s172, %s188
      %p190 = scmp.eq.s32.totalorder %s25, 0
      %p191 = por %p189, %p190
      %s192 = ssub.s32 %s26, %s38
      %p193 = scmp.eq.s32.totalorder %s192, 0
      %s195 = sadd.s32 %s194, 1
      %s196 = scalar_select %p193, %s194, %s195
      %p199 = pneg %p193
      %p200 = scmp.eq.s32.totalorder %s19, 1
      %p201 = por %p199, %p200
      %p202 = scmp.ne.s32.totalorder %s194, %s197
      %p203 = scmp.eq.s32.totalorder %s19, 0
      %p204 = por %p202, %p203
      %p205 = scmp.ne.s32.totalorder %s194, %s197
      %p206 = scmp.eq.s32.totalorder %s24, 1
      %p207 = por %p205, %p206
      %p208 = scmp.ne.s32.totalorder %s197, %s198
      %p209 = scmp.eq.s32.totalorder %s24, 0
      %p210 = por %p208, %p209
      %p211 = scmp.ne.s32.totalorder %s197, %s198
      %p212 = scmp.eq.s32.totalorder %s25, 1
      %p213 = por %p211, %p212
      %p215 = scmp.ne.s32.totalorder %s198, %s214
      %p216 = scmp.eq.s32.totalorder %s25, 0
      %p217 = por %p215, %p216
      %p218 = scmp.le.s32.totalorder 1, %s19
      %p219 = scmp.lt.s32.totalorder %s19, 3
      %p220 = pnand %p218, %p219
      %p221 = pneg %p220
      // Predicated region
      $region9: #{tpu_custom_call.1} parent=5 // pred_check
        _
      $region10: #{tpu_custom_call.1} parent=5 // pred_check_branch
        %223 = sbr.rel (%p220) target = $region12
      $region11: #{tpu_custom_call.1} parent=5 // pred_region
        %s224 = ssub.s32 %s19, 1
        // Predicated region
        $region13: #{tpu_custom_call.1} parent=11 // pred_check
          %p225 = pneg %p85
        $region14: #{tpu_custom_call.1} parent=11 // pred_check_branch
          %227 = sbr.rel (%p225) target = $region16
        $region15: #{tpu_custom_call.1} parent=11 // pred_region
          %s228 = smul.u32 2, %s29
          %p229 = scmp.lt.s32.totalorder %s228, 1
          %s230 = scalar_select %p229, %s228, 1
          %s231 = smul.addr %s230, 8
          %s232 = scalar_lea.vmem %s1, %s231
          %s233 = smul.u32 2, %s29
        $region16: #{tpu_custom_call.1} parent=11 // pred_fallthru
          _
        // Predicated region
        $region17: #{tpu_custom_call.1} parent=11 // pred_check
          %p234 = pneg %p106
        $region18: #{tpu_custom_call.1} parent=11 // pred_check_branch
          %236 = sbr.rel (%p234) target = $region20
        $region19: #{tpu_custom_call.1} parent=11 // pred_region
          _
        $region20: #{tpu_custom_call.1} parent=11 // pred_fallthru
          _
      $region12: #{tpu_custom_call.1} parent=5 // pred_fallthru
        _
      %p237 = scmp.lt.s32.totalorder %s19, 2
      // Predicated region
      $region21: #{tpu_custom_call.1} parent=5 // pred_check
        %p238 = pneg %p237
      $region22: #{tpu_custom_call.1} parent=5 // pred_check_branch
        %240 = sbr.rel (%p238) target = $region24
      $region23: #{tpu_custom_call.1} parent=5 // pred_region
        // Predicated region
        $region25: #{tpu_custom_call.1} parent=23 // pred_check
          %p241 = pneg %p53
        $region26: #{tpu_custom_call.1} parent=23 // pred_check_branch
          %243 = sbr.rel (%p241) target = $region28
        $region27: #{tpu_custom_call.1} parent=23 // pred_region
          %s244 = sand.u32 %s43, 1
          %s245 = scalar_lea.sflag [#allocation4], %s244
          %s246 = sand.u32 %s43, 1
          %s247 = smul.addr %s246, 16
          %s248 = scalar_lea.vmem [#allocation3], %s247
          %s249 = smul.u32 2, %s27
          %s251 = ssub.s32 256, 256
          %252 = vsyncadd %s245, %s251
          %s253 = smul.addr %s26, 2
          %s254 = sadd.s32 %s249, %s253
          %s255 = smul.addr %s254, 128
          %s256 = scalar_lea.hbm %s0, %s255
          %s257 = sshll.u32 %s248, 4
          %s258 = int_to_ptr.vmem [resolvable:$true] %s257
          %263 = dma.hbm_to_vmem [thread:$0]  %s256, 256, %s258, %s245, 128, 128, 8
        $region28: #{tpu_custom_call.1} parent=23 // pred_fallthru
          _
        // Predicated region
        $region29: #{tpu_custom_call.1} parent=23 // pred_check
          %p264 = pneg %p126
        $region30: #{tpu_custom_call.1} parent=23 // pred_check_branch
          %266 = sbr.rel (%p264) target = $region32
        $region31: #{tpu_custom_call.1} parent=23 // pred_region
          %s267 = sand.u32 %s19, 1
          %s268 = scalar_lea.sflag [#allocation6], %s267
          %s269 = sand.u32 %s116, 1
          %s270 = smul.addr %s269, 32
          %s271 = scalar_lea.vmem [#allocation5], %s270
          %s273 = ssub.s32 512, 512
          %274 = vsyncadd %s268, %s273
          %s275 = smul.addr %s26, 4
          %s276 = smul.addr %s275, 128
          %s277 = scalar_lea.hbm %s3, %s276
          %s278 = sshll.u32 %s271, 4
          %s279 = int_to_ptr.vmem [resolvable:$true] %s278
          %284 = dma.hbm_to_vmem [thread:$0]  %s277, 512, %s279, %s268, 128, 128, 8
        $region32: #{tpu_custom_call.1} parent=23 // pred_fallthru
          _
        // Predicated region
        $region33: #{tpu_custom_call.1} parent=23 // pred_check
          %p285 = pneg %p152
        $region34: #{tpu_custom_call.1} parent=23 // pred_check_branch
          %287 = sbr.rel (%p285) target = $region36
        $region35: #{tpu_custom_call.1} parent=23 // pred_region
          %s288 = sand.u32 %s19, 1
          %s289 = scalar_lea.sflag [#allocation6], %s288
          %s290 = sand.u32 %s142, 1
          %s291 = smul.addr %s290, 32
          %s292 = scalar_lea.vmem [#allocation7], %s291
          %s294 = ssub.s32 512, 512
          %295 = vsyncadd %s289, %s294
          %s296 = smul.addr %s26, 4
          %s297 = smul.addr %s296, 128
          %s298 = scalar_lea.hbm %s4, %s297
          %s299 = sshll.u32 %s292, 4
          %s300 = int_to_ptr.vmem [resolvable:$true] %s299
          %305 = dma.hbm_to_vmem [thread:$0]  %s298, 512, %s300, %s289, 128, 128, 8
        $region36: #{tpu_custom_call.1} parent=23 // pred_fallthru
          _
      $region24: #{tpu_custom_call.1} parent=5 // pred_fallthru
        _
      %p306 = scmp.le.s32.totalorder 1, %s19
      %p307 = scmp.lt.s32.totalorder %s19, 3
      %p308 = pnand %p306, %p307
      %p309 = pneg %p308
      // Predicated region
      $region37: #{tpu_custom_call.1} parent=5 // pred_check
        _
      $region38: #{tpu_custom_call.1} parent=5 // pred_check_branch
        %311 = sbr.rel (%p308) target = $region40
      $region39: #{tpu_custom_call.1} parent=5 // pred_region
        %s312 = ssub.s32 %s19, 1
        %s313 = sand.u32 %s46, 1
        %s314 = scalar_lea.sflag [#allocation4], %s313
        %s315 = sand.u32 %s46, 1
        %s316 = smul.addr %s315, 16
        %s317 = scalar_lea.vmem [#allocation3], %s316
        // Predicated region
        $region41: #{tpu_custom_call.1} parent=39 // pred_check
          %p318 = pneg %p59
        $region42: #{tpu_custom_call.1} parent=39 // pred_check_branch
          %320 = sbr.rel (%p318) target = $region44
        $region43: #{tpu_custom_call.1} parent=39 // pred_region
          %321 = dma.done %s314, 256
        $region44: #{tpu_custom_call.1} parent=39 // pred_fallthru
          _
        %s322 = sand.u32 %s24, 1
        %s323 = scalar_lea.sflag [#allocation6], %s322
        %s324 = sand.u32 %s119, 1
        %s325 = smul.addr %s324, 32
        %s326 = scalar_lea.vmem [#allocation5], %s325
        // Predicated region
        $region45: #{tpu_custom_call.1} parent=39 // pred_check
          %p327 = pneg %p132
        $region46: #{tpu_custom_call.1} parent=39 // pred_check_branch
          %329 = sbr.rel (%p327) target = $region48
        $region47: #{tpu_custom_call.1} parent=39 // pred_region
          %330 = dma.done %s323, 512
        $region48: #{tpu_custom_call.1} parent=39 // pred_fallthru
          _
        %s331 = sand.u32 %s24, 1
        %s332 = scalar_lea.sflag [#allocation6], %s331
        %s333 = sand.u32 %s145, 1
        %s334 = smul.addr %s333, 32
        %s335 = scalar_lea.vmem [#allocation7], %s334
        // Predicated region
        $region49: #{tpu_custom_call.1} parent=39 // pred_check
          %p336 = pneg %p158
        $region50: #{tpu_custom_call.1} parent=39 // pred_check_branch
          %338 = sbr.rel (%p336) target = $region52
        $region51: #{tpu_custom_call.1} parent=39 // pred_region
          %339 = dma.done %s332, 512
        $region52: #{tpu_custom_call.1} parent=39 // pred_fallthru
          _
        %s340 = sand.u32 %s46, 1
        %s341 = scalar_lea.sflag [#allocation4], %s340
        %s342 = sand.u32 %s46, 1
        %s343 = smul.addr %s342, 16
        %s344 = scalar_lea.vmem [#allocation3], %s343
        %p345 = pneg %p59
        %p346 = pneg %p56
        %s347 = smul.u32 2, %s29
        %p348 = scmp.lt.s32.totalorder %s347, 1
        %s349 = scalar_select %p348, %s347, 1
        %s350 = smul.addr %s349, 8
        %s351 = scalar_lea.vmem %s1, %s350
        %p352 = pneg %p85
        %p353 = pneg %p82
        %p354 = pneg %p106
        %p355 = pneg %p103
        %s356 = sand.u32 %s24, 1
        %s357 = scalar_lea.sflag [#allocation6], %s356
        %s358 = sand.u32 %s119, 1
        %s359 = smul.addr %s358, 32
        %s360 = scalar_lea.vmem [#allocation5], %s359
        %p361 = pneg %p132
        %p362 = pneg %p129
        %s363 = sand.u32 %s24, 1
        %s364 = scalar_lea.sflag [#allocation6], %s363
        %s365 = sand.u32 %s145, 1
        %s366 = smul.addr %s365, 32
        %s367 = scalar_lea.vmem [#allocation7], %s366
        %p368 = pneg %p158
        %p369 = pneg %p155
        %p370 = pneg %p184
        %p371 = pneg %p181
        %p372 = scmp.lt.s32.totalorder %s28, 1
        %s373 = scalar_select %p372, %s28, 1
        %s374 = scalar_lea.vmem %s5, %s373
        %p375 = pneg %p210
        %p376 = pneg %p207
        %p377 = scmp.lt.s32.totalorder %s28, 1
        %s378 = scalar_select %p377, %s28, 1
        %s379 = scalar_lea.vmem %s6, %s378
        %s380 = smul.u32 2, %s29
        %s381 = smul.u32 2, %s29
        %p382 = scmp.lt.s32.totalorder %s381, 1
        %s383 = scalar_select %p382, %s381, 1
        %s384 = smul.addr %s383, 8
        %s385 = scalar_lea.vmem %s1, %s384
        %s386 = smul.u32 2, %s29
        %p387 = scmp.lt.s32.totalorder %s28, 1
        %s388 = scalar_select %p387, %s28, 1
        %s389 = scalar_lea.vmem %s5, %s388
        %p390 = scmp.lt.s32.totalorder %s28, 1
        %s391 = scalar_select %p390, %s28, 1
        %s392 = scalar_lea.vmem %s6, %s391
        %p393 = scmp.eq.s32.totalorder %s29, 0
        // Predicated region
        $region53: #{tpu_custom_call.1} parent=39 // pred_check
          %p394 = pneg %p393
        $region54: #{tpu_custom_call.1} parent=39 // pred_check_branch
          %396 = sbr.rel (%p394) target = $region56
        $region55: #{tpu_custom_call.1} parent=39 // pred_region
          %vm397 = vcmask 0
          %398 = vst.msk [vmem:[%s389] sm:$0x1] %vm397, 0.0
          %399 = vst.msk [vmem:[%s392] sm:$0x1] %vm397, 0.0
          %v400 = vld [vmem:[%s2] sm:$0xff]
          %v401 = vld [vmem:[%s326] sm:$0xff]
          %v402 = vld [vmem:[%s326 + $0x8] sm:$0xff]
          %v403 = vld [vmem:[%s326 + $0x10] sm:$0xff]
          %v404 = vld [vmem:[%s326 + $0x18] sm:$0xff]
          %vm405 = vcmask 64512
          %v407 = vsel %vm405, %v401, 0
          %v410 = vsel %vm405, %v402, 0
          %v413 = vsel %vm405, %v403, 0
          %v416 = vsel %vm405, %v404, 0
          %418 = vmatprep.subr.mxu0 0.0
          %419 = vmatpush1.msra.mxu0 0.0
          %420 = vmatprep.subr.mxu0 0.0
          %421 = vmatpush1.msra.mxu0 0.0
          %422 = vmatprep.subr.mxu0 0.0
          %423 = vmatpush1.msra.mxu0 0.0
          %424 = vmatprep.subr.mxu0 0.0
          %425 = vmatpush1.msra.mxu0 0.0
          %426 = vmatprep.subr.mxu0 0.0
          %427 = vmatpush1.msra.mxu0 0.0
          %428 = vmatprep.subr.mxu0 0.0
          %429 = vmatpush1.msra.mxu0 0.0
          %430 = vmatprep.subr.mxu0 0.0
          %431 = vmatpush1.msra.mxu0 0.0
          %432 = vmatprep.subr.mxu0 0.0
          %433 = vmatpush1.msra.mxu0 0.0
          %434 = vmatprep.subr.mxu0 0.0
          %435 = vmatpush1.msra.mxu0 0.0
          %436 = vmatprep.subr.mxu0 0.0
          %437 = vmatpush1.msra.mxu0 0.0
          %438 = vmatprep.subr.mxu0 0.0
          %439 = vmatpush1.msra.mxu0 0.0
          %440 = vmatprep.subr.mxu0 0.0
          %441 = vmatpush1.msra.mxu0 0.0
          %442 = vmatprep.subr.mxu0 0.0
          %443 = vmatpush1.msra.mxu0 0.0
          %444 = vmatprep.subr.mxu0 0.0
          %445 = vmatpush1.msra.mxu0 0.0
          %446 = vmatprep.subr.mxu0 0.0
          %447 = vmatpush1.msra.mxu0 0.0
          %448 = vmatprep.subr.mxu0 0.0
          %449 = vmatpush1.msra.mxu0 %v400
          %450 = vmatprep.subr.mxu0 0.0
          %451 = vmatpush2.msra.mxu0 0.0
          %452 = vmatprep.subr.mxu0 0.0
          %453 = vmatpush2.msra.mxu0 0.0
          %454 = vmatprep.subr.mxu0 0.0
          %455 = vmatpush2.msra.mxu0 0.0
          %456 = vmatprep.subr.mxu0 0.0
          %457 = vmatpush2.msra.mxu0 0.0
          %458 = vmatprep.subr.mxu0 0.0
          %459 = vmatpush2.msra.mxu0 0.0
          %460 = vmatprep.subr.mxu0 0.0
          %461 = vmatpush2.msra.mxu0 0.0
          %462 = vmatprep.subr.mxu0 0.0
          %463 = vmatpush2.msra.mxu0 0.0
          %464 = vmatprep.subr.mxu0 0.0
          %465 = vmatpush2.msra.mxu0 0.0
          %466 = vmatprep.subr.mxu0 0.0
          %467 = vmatpush2.msra.mxu0 0.0
          %468 = vmatprep.subr.mxu0 0.0
          %469 = vmatpush2.msra.mxu0 0.0
          %470 = vmatprep.subr.mxu0 0.0
          %471 = vmatpush2.msra.mxu0 0.0
          %472 = vmatprep.subr.mxu0 0.0
          %473 = vmatpush2.msra.mxu0 0.0
          %474 = vmatprep.subr.mxu0 0.0
          %475 = vmatpush2.msra.mxu0 0.0
          %476 = vmatprep.subr.mxu0 0.0
          %477 = vmatpush2.msra.mxu0 0.0
          %478 = vmatprep.subr.mxu0 0.0
          %479 = vmatpush2.msra.mxu0 0.0
          %480 = vmatprep.subr.mxu0 0.0
          %481 = vmatpush2.msra.mxu0 0.0
          %482 = vmatprep.mubr.f32.mxu0 0.0
          %483 = vmatmul.mubr.f32.gmra.mxu0 %v407
          %v484 = vpop.f32.mrf.mxu0
          %v485 = vadd.f32 0.0, %v484
          %v486 = vpop.f32.mrf.mxu0
          %487 = vmatprep.mubr.f32.mxu0 0.0
          %488 = vmatmul.mubr.f32.gmra.mxu0 %v410
          %v489 = vpop.f32.mrf.mxu0
          %v490 = vadd.f32 0.0, %v489
          %v491 = vpop.f32.mrf.mxu0
          %492 = vmatprep.mubr.f32.mxu0 0.0
          %493 = vmatmul.mubr.f32.gmra.mxu0 %v413
          %v494 = vpop.f32.mrf.mxu0
          %v495 = vadd.f32 0.0, %v494
          %v496 = vpop.f32.mrf.mxu0
          %497 = vmatprep.mubr.f32.mxu0 0.0
          %498 = vmatmul.mubr.f32.gmra.mxu0 %v416
          %v499 = vpop.f32.mrf.mxu0
          %v500 = vadd.f32 0.0, %v499
          %v501 = vpop.f32.mrf.mxu0
          %502 = vdwg.mxu0
          %vm503 = vcmask 130048
          %504 = vst.msk [vmem:[#allocation2] sm:$0xff] %vm503, %v485
          %505 = vst.msk [vmem:[#allocation2 + $0x8] sm:$0xff] %vm503, %v490
          %506 = vst.msk [vmem:[#allocation2 + $0x10] sm:$0xff] %vm503, %v495
          %507 = vst.msk [vmem:[#allocation2 + $0x18] sm:$0xff] %vm503, %v500
          %v508 = vld [vmem:[%s335] sm:$0xff]
          %v509 = vld [vmem:[%s335 + $0x8] sm:$0xff]
          %v510 = vld [vmem:[%s335 + $0x10] sm:$0xff]
          %v511 = vld [vmem:[%s335 + $0x18] sm:$0xff]
          %v513 = vsel %vm405, %v508, 0
          %v516 = vsel %vm405, %v509, 0
          %v519 = vsel %vm405, %v510, 0
          %v522 = vsel %vm405, %v511, 0
          %524 = vmatprep.subr.mxu0 0.0
          %525 = vmatpush1.msra.mxu0 0.0
          %526 = vmatprep.subr.mxu0 0.0
          %527 = vmatpush1.msra.mxu0 0.0
          %528 = vmatprep.subr.mxu0 0.0
          %529 = vmatpush1.msra.mxu0 0.0
          %530 = vmatprep.subr.mxu0 0.0
          %531 = vmatpush1.msra.mxu0 0.0
          %532 = vmatprep.subr.mxu0 0.0
          %533 = vmatpush1.msra.mxu0 0.0
          %534 = vmatprep.subr.mxu0 0.0
          %535 = vmatpush1.msra.mxu0 0.0
          %536 = vmatprep.subr.mxu0 0.0
          %537 = vmatpush1.msra.mxu0 0.0
          %538 = vmatprep.subr.mxu0 0.0
          %539 = vmatpush1.msra.mxu0 0.0
          %540 = vmatprep.subr.mxu0 0.0
          %541 = vmatpush1.msra.mxu0 0.0
          %542 = vmatprep.subr.mxu0 0.0
          %543 = vmatpush1.msra.mxu0 0.0
          %544 = vmatprep.subr.mxu0 0.0
          %545 = vmatpush1.msra.mxu0 0.0
          %546 = vmatprep.subr.mxu0 0.0
          %547 = vmatpush1.msra.mxu0 0.0
          %548 = vmatprep.subr.mxu0 0.0
          %549 = vmatpush1.msra.mxu0 0.0
          %550 = vmatprep.subr.mxu0 0.0
          %551 = vmatpush1.msra.mxu0 0.0
          %552 = vmatprep.subr.mxu0 0.0
          %553 = vmatpush1.msra.mxu0 0.0
          %554 = vmatprep.subr.mxu0 0.0
          %555 = vmatpush1.msra.mxu0 %v400
          %556 = vmatprep.subr.mxu0 0.0
          %557 = vmatpush2.msra.mxu0 0.0
          %558 = vmatprep.subr.mxu0 0.0
          %559 = vmatpush2.msra.mxu0 0.0
          %560 = vmatprep.subr.mxu0 0.0
          %561 = vmatpush2.msra.mxu0 0.0
          %562 = vmatprep.subr.mxu0 0.0
          %563 = vmatpush2.msra.mxu0 0.0
          %564 = vmatprep.subr.mxu0 0.0
          %565 = vmatpush2.msra.mxu0 0.0
          %566 = vmatprep.subr.mxu0 0.0
          %567 = vmatpush2.msra.mxu0 0.0
          %568 = vmatprep.subr.mxu0 0.0
          %569 = vmatpush2.msra.mxu0 0.0
          %570 = vmatprep.subr.mxu0 0.0
          %571 = vmatpush2.msra.mxu0 0.0
          %572 = vmatprep.subr.mxu0 0.0
          %573 = vmatpush2.msra.mxu0 0.0
          %574 = vmatprep.subr.mxu0 0.0
          %575 = vmatpush2.msra.mxu0 0.0
          %576 = vmatprep.subr.mxu0 0.0
          %577 = vmatpush2.msra.mxu0 0.0
          %578 = vmatprep.subr.mxu0 0.0
          %579 = vmatpush2.msra.mxu0 0.0
          %580 = vmatprep.subr.mxu0 0.0
          %581 = vmatpush2.msra.mxu0 0.0
          %582 = vmatprep.subr.mxu0 0.0
          %583 = vmatpush2.msra.mxu0 0.0
          %584 = vmatprep.subr.mxu0 0.0
          %585 = vmatpush2.msra.mxu0 0.0
          %586 = vmatprep.subr.mxu0 0.0
          %587 = vmatpush2.msra.mxu0 0.0
          %588 = vmatprep.mubr.f32.mxu0 0.0
          %589 = vmatmul.mubr.f32.gmra.mxu0 %v513
          %v590 = vpop.f32.mrf.mxu0
          %v591 = vadd.f32 0.0, %v590
          %v592 = vpop.f32.mrf.mxu0
          %593 = vmatprep.mubr.f32.mxu0 0.0
          %594 = vmatmul.mubr.f32.gmra.mxu0 %v516
          %v595 = vpop.f32.mrf.mxu0
          %v596 = vadd.f32 0.0, %v595
          %v597 = vpop.f32.mrf.mxu0
          %598 = vmatprep.mubr.f32.mxu0 0.0
          %599 = vmatmul.mubr.f32.gmra.mxu0 %v519
          %v600 = vpop.f32.mrf.mxu0
          %v601 = vadd.f32 0.0, %v600
          %v602 = vpop.f32.mrf.mxu0
          %603 = vmatprep.mubr.f32.mxu0 0.0
          %604 = vmatmul.mubr.f32.gmra.mxu0 %v522
          %v605 = vpop.f32.mrf.mxu0
          %v606 = vadd.f32 0.0, %v605
          %v607 = vpop.f32.mrf.mxu0
          %608 = vdwg.mxu0
          %s609 = scalar_lea.vmem [#allocation2], 32
          %610 = vst.msk [vmem:[%s609] sm:$0xff] %vm503, %v591
          %611 = vst.msk [vmem:[%s609 + $0x8] sm:$0xff] %vm503, %v596
          %612 = vst.msk [vmem:[%s609 + $0x10] sm:$0xff] %vm503, %v601
          %613 = vst.msk [vmem:[%s609 + $0x18] sm:$0xff] %vm503, %v606
        $region56: #{tpu_custom_call.1} parent=39 // pred_fallthru
          _
        %v614 = vld [vmem:[%s385] sm:$0xff]
        %v615 = vld [vmem:[%s385 + $0x8] sm:$0xff]
        %v616 = vld [vmem:[%s317] sm:$0xff]
        %v617 = vld [vmem:[%s317 + $0x8] sm:$0xff]
        %vm618 = vcmp.ne.s32.totalorder %v616, 255
        %vm619 = vcmp.ne.s32.totalorder %v617, 255
        %v620 = vsel %vm618, %v616, 0
        %v621 = vsel %vm619, %v617, 0
        %v622 = vld [vmem:[#allocation2] sm:$0xff]
        %vm623 = vcmask 64512
        %v625 = vsel %vm623, %v614, 0
        %v628 = vsel %vm623, %v615, 0
        %630 = vmatprep.subr.mxu0 0.0
        %631 = vmatpush1.msra.mxu0 0.0
        %632 = vmatprep.subr.mxu0 0.0
        %633 = vmatpush1.msra.mxu0 0.0
        %634 = vmatprep.subr.mxu0 0.0
        %635 = vmatpush1.msra.mxu0 0.0
        %636 = vmatprep.subr.mxu0 0.0
        %637 = vmatpush1.msra.mxu0 0.0
        %638 = vmatprep.subr.mxu0 0.0
        %639 = vmatpush1.msra.mxu0 0.0
        %640 = vmatprep.subr.mxu0 0.0
        %641 = vmatpush1.msra.mxu0 0.0
        %642 = vmatprep.subr.mxu0 0.0
        %643 = vmatpush1.msra.mxu0 0.0
        %644 = vmatprep.subr.mxu0 0.0
        %645 = vmatpush1.msra.mxu0 0.0
        %646 = vmatprep.subr.mxu0 0.0
        %647 = vmatpush1.msra.mxu0 0.0
        %648 = vmatprep.subr.mxu0 0.0
        %649 = vmatpush1.msra.mxu0 0.0
        %650 = vmatprep.subr.mxu0 0.0
        %651 = vmatpush1.msra.mxu0 0.0
        %652 = vmatprep.subr.mxu0 0.0
        %653 = vmatpush1.msra.mxu0 0.0
        %654 = vmatprep.subr.mxu0 0.0
        %655 = vmatpush1.msra.mxu0 0.0
        %656 = vmatprep.subr.mxu0 0.0
        %657 = vmatpush1.msra.mxu0 0.0
        %658 = vmatprep.subr.mxu0 0.0
        %659 = vmatpush1.msra.mxu0 0.0
        %660 = vmatprep.subr.mxu0 0.0
        %661 = vmatpush1.msra.mxu0 %v622
        %662 = vmatprep.subr.mxu0 0.0
        %663 = vmatpush2.msra.mxu0 0.0
        %664 = vmatprep.subr.mxu0 0.0
        %665 = vmatpush2.msra.mxu0 0.0
        %666 = vmatprep.subr.mxu0 0.0
        %667 = vmatpush2.msra.mxu0 0.0
        %668 = vmatprep.subr.mxu0 0.0
        %669 = vmatpush2.msra.mxu0 0.0
        %670 = vmatprep.subr.mxu0 0.0
        %671 = vmatpush2.msra.mxu0 0.0
        %672 = vmatprep.subr.mxu0 0.0
        %673 = vmatpush2.msra.mxu0 0.0
        %674 = vmatprep.subr.mxu0 0.0
        %675 = vmatpush2.msra.mxu0 0.0
        %676 = vmatprep.subr.mxu0 0.0
        %677 = vmatpush2.msra.mxu0 0.0
        %678 = vmatprep.subr.mxu0 0.0
        %679 = vmatpush2.msra.mxu0 0.0
        %680 = vmatprep.subr.mxu0 0.0
        %681 = vmatpush2.msra.mxu0 0.0
        %682 = vmatprep.subr.mxu0 0.0
        %683 = vmatpush2.msra.mxu0 0.0
        %684 = vmatprep.subr.mxu0 0.0
        %685 = vmatpush2.msra.mxu0 0.0
        %686 = vmatprep.subr.mxu0 0.0
        %687 = vmatpush2.msra.mxu0 0.0
        %688 = vmatprep.subr.mxu0 0.0
        %689 = vmatpush2.msra.mxu0 0.0
        %690 = vmatprep.subr.mxu0 0.0
        %691 = vmatpush2.msra.mxu0 0.0
        %692 = vmatprep.subr.mxu0 0.0
        %693 = vmatpush2.msra.mxu0 0.0
        %694 = vmatprep.mubr.f32.mxu0 0.0
        %695 = vmatmul.mubr.f32.gmra.mxu0 %v625
        %v696 = vpop.f32.mrf.mxu0
        %v697 = vadd.f32 0.0, %v696
        %v698 = vpop.f32.mrf.mxu0
        %699 = vmatprep.mubr.f32.mxu0 0.0
        %700 = vmatmul.mubr.f32.gmra.mxu0 %v628
        %v701 = vpop.f32.mrf.mxu0
        %v702 = vadd.f32 0.0, %v701
        %v703 = vpop.f32.mrf.mxu0
        %704 = vdwg.mxu0
        %vm705 = vcmp.eq.s32.totalorder %v620, 0
        %vm706 = vcmp.eq.s32.totalorder %v621, 0
        %v707 = vsel %vm705, %v697, 0.0
        %v708 = vsel %vm706, %v702, 0.0
        %s709 = scalar_lea.vmem [#allocation2], 8
        %v710 = vld [vmem:[%s709] sm:$0xff]
        %711 = vmatprep.subr.mxu0 0.0
        %712 = vmatpush1.msra.mxu0 0.0
        %713 = vmatprep.subr.mxu0 0.0
        %714 = vmatpush1.msra.mxu0 0.0
        %715 = vmatprep.subr.mxu0 0.0
        %716 = vmatpush1.msra.mxu0 0.0
        %717 = vmatprep.subr.mxu0 0.0
        %718 = vmatpush1.msra.mxu0 0.0
        %719 = vmatprep.subr.mxu0 0.0
        %720 = vmatpush1.msra.mxu0 0.0
        %721 = vmatprep.subr.mxu0 0.0
        %722 = vmatpush1.msra.mxu0 0.0
        %723 = vmatprep.subr.mxu0 0.0
        %724 = vmatpush1.msra.mxu0 0.0
        %725 = vmatprep.subr.mxu0 0.0
        %726 = vmatpush1.msra.mxu0 0.0
        %727 = vmatprep.subr.mxu0 0.0
        %728 = vmatpush1.msra.mxu0 0.0
        %729 = vmatprep.subr.mxu0 0.0
        %730 = vmatpush1.msra.mxu0 0.0
        %731 = vmatprep.subr.mxu0 0.0
        %732 = vmatpush1.msra.mxu0 0.0
        %733 = vmatprep.subr.mxu0 0.0
        %734 = vmatpush1.msra.mxu0 0.0
        %735 = vmatprep.subr.mxu0 0.0
        %736 = vmatpush1.msra.mxu0 0.0
        %737 = vmatprep.subr.mxu0 0.0
        %738 = vmatpush1.msra.mxu0 0.0
        %739 = vmatprep.subr.mxu0 0.0
        %740 = vmatpush1.msra.mxu0 0.0
        %741 = vmatprep.subr.mxu0 0.0
        %742 = vmatpush1.msra.mxu0 %v710
        %743 = vmatprep.subr.mxu0 0.0
        %744 = vmatpush2.msra.mxu0 0.0
        %745 = vmatprep.subr.mxu0 0.0
        %746 = vmatpush2.msra.mxu0 0.0
        %747 = vmatprep.subr.mxu0 0.0
        %748 = vmatpush2.msra.mxu0 0.0
        %749 = vmatprep.subr.mxu0 0.0
        %750 = vmatpush2.msra.mxu0 0.0
        %751 = vmatprep.subr.mxu0 0.0
        %752 = vmatpush2.msra.mxu0 0.0
        %753 = vmatprep.subr.mxu0 0.0
        %754 = vmatpush2.msra.mxu0 0.0
        %755 = vmatprep.subr.mxu0 0.0
        %756 = vmatpush2.msra.mxu0 0.0
        %757 = vmatprep.subr.mxu0 0.0
        %758 = vmatpush2.msra.mxu0 0.0
        %759 = vmatprep.subr.mxu0 0.0
        %760 = vmatpush2.msra.mxu0 0.0
        %761 = vmatprep.subr.mxu0 0.0
        %762 = vmatpush2.msra.mxu0 0.0
        %763 = vmatprep.subr.mxu0 0.0
        %764 = vmatpush2.msra.mxu0 0.0
        %765 = vmatprep.subr.mxu0 0.0
        %766 = vmatpush2.msra.mxu0 0.0
        %767 = vmatprep.subr.mxu0 0.0
        %768 = vmatpush2.msra.mxu0 0.0
        %769 = vmatprep.subr.mxu0 0.0
        %770 = vmatpush2.msra.mxu0 0.0
        %771 = vmatprep.subr.mxu0 0.0
        %772 = vmatpush2.msra.mxu0 0.0
        %773 = vmatprep.subr.mxu0 0.0
        %774 = vmatpush2.msra.mxu0 0.0
        %775 = vmatprep.mubr.f32.mxu0 0.0
        %776 = vmatmul.mubr.f32.gmra.mxu0 %v625
        %v777 = vpop.f32.mrf.mxu0
        %v778 = vadd.f32 0.0, %v777
        %v779 = vpop.f32.mrf.mxu0
        %780 = vmatprep.mubr.f32.mxu0 0.0
        %781 = vmatmul.mubr.f32.gmra.mxu0 %v628
        %v782 = vpop.f32.mrf.mxu0
        %v783 = vadd.f32 0.0, %v782
        %v784 = vpop.f32.mrf.mxu0
        %785 = vdwg.mxu0
        %v786 = vmax.f32 %v697, %v778
        %v787 = vmax.f32 %v702, %v783
        %v788 = vsub.f32 %v697, %v786
        %v789 = vsub.f32 %v702, %v787
        %v790 = vmul.f32 %v788, 1.442695
        %v791 = vpow.pop %v790
        %v792 = vmul.f32 %v789, 1.442695
        %v793 = vpow.pop %v792
        %v794 = vsub.f32 %v778, %v786
        %v795 = vsub.f32 %v783, %v787
        %v796 = vmul.f32 %v794, 1.442695
        %v797 = vpow.pop %v796
        %v798 = vmul.f32 %v795, 1.442695
        %v799 = vpow.pop %v798
        %v800 = vadd.f32 %v791, %v797
        %v801 = vadd.f32 %v793, %v799
        %vm802 = vcmp.eq.s32.totalorder %v620, 1
        %vm803 = vcmp.eq.s32.totalorder %v621, 1
        %v804 = vsel %vm802, %v778, 0.0
        %v805 = vsel %vm803, %v783, 0.0
        %v806 = vadd.f32 %v707, %v804
        %v807 = vadd.f32 %v708, %v805
        %s808 = scalar_lea.vmem [#allocation2], 16
        %v809 = vld [vmem:[%s808] sm:$0xff]
        %810 = vmatprep.subr.mxu0 0.0
        %811 = vmatpush1.msra.mxu0 0.0
        %812 = vmatprep.subr.mxu0 0.0
        %813 = vmatpush1.msra.mxu0 0.0
        %814 = vmatprep.subr.mxu0 0.0
        %815 = vmatpush1.msra.mxu0 0.0
        %816 = vmatprep.subr.mxu0 0.0
        %817 = vmatpush1.msra.mxu0 0.0
        %818 = vmatprep.subr.mxu0 0.0
        %819 = vmatpush1.msra.mxu0 0.0
        %820 = vmatprep.subr.mxu0 0.0
        %821 = vmatpush1.msra.mxu0 0.0
        %822 = vmatprep.subr.mxu0 0.0
        %823 = vmatpush1.msra.mxu0 0.0
        %824 = vmatprep.subr.mxu0 0.0
        %825 = vmatpush1.msra.mxu0 0.0
        %826 = vmatprep.subr.mxu0 0.0
        %827 = vmatpush1.msra.mxu0 0.0
        %828 = vmatprep.subr.mxu0 0.0
        %829 = vmatpush1.msra.mxu0 0.0
        %830 = vmatprep.subr.mxu0 0.0
        %831 = vmatpush1.msra.mxu0 0.0
        %832 = vmatprep.subr.mxu0 0.0
        %833 = vmatpush1.msra.mxu0 0.0
        %834 = vmatprep.subr.mxu0 0.0
        %835 = vmatpush1.msra.mxu0 0.0
        %836 = vmatprep.subr.mxu0 0.0
        %837 = vmatpush1.msra.mxu0 0.0
        %838 = vmatprep.subr.mxu0 0.0
        %839 = vmatpush1.msra.mxu0 0.0
        %840 = vmatprep.subr.mxu0 0.0
        %841 = vmatpush1.msra.mxu0 %v809
        %842 = vmatprep.subr.mxu0 0.0
        %843 = vmatpush2.msra.mxu0 0.0
        %844 = vmatprep.subr.mxu0 0.0
        %845 = vmatpush2.msra.mxu0 0.0
        %846 = vmatprep.subr.mxu0 0.0
        %847 = vmatpush2.msra.mxu0 0.0
        %848 = vmatprep.subr.mxu0 0.0
        %849 = vmatpush2.msra.mxu0 0.0
        %850 = vmatprep.subr.mxu0 0.0
        %851 = vmatpush2.msra.mxu0 0.0
        %852 = vmatprep.subr.mxu0 0.0
        %853 = vmatpush2.msra.mxu0 0.0
        %854 = vmatprep.subr.mxu0 0.0
        %855 = vmatpush2.msra.mxu0 0.0
        %856 = vmatprep.subr.mxu0 0.0
        %857 = vmatpush2.msra.mxu0 0.0
        %858 = vmatprep.subr.mxu0 0.0
        %859 = vmatpush2.msra.mxu0 0.0
        %860 = vmatprep.subr.mxu0 0.0
        %861 = vmatpush2.msra.mxu0 0.0
        %862 = vmatprep.subr.mxu0 0.0
        %863 = vmatpush2.msra.mxu0 0.0
        %864 = vmatprep.subr.mxu0 0.0
        %865 = vmatpush2.msra.mxu0 0.0
        %866 = vmatprep.subr.mxu0 0.0
        %867 = vmatpush2.msra.mxu0 0.0
        %868 = vmatprep.subr.mxu0 0.0
        %869 = vmatpush2.msra.mxu0 0.0
        %870 = vmatprep.subr.mxu0 0.0
        %871 = vmatpush2.msra.mxu0 0.0
        %872 = vmatprep.subr.mxu0 0.0
        %873 = vmatpush2.msra.mxu0 0.0
        %874 = vmatprep.mubr.f32.mxu0 0.0
        %875 = vmatmul.mubr.f32.gmra.mxu0 %v625
        %v876 = vpop.f32.mrf.mxu0
        %v877 = vadd.f32 0.0, %v876
        %v878 = vpop.f32.mrf.mxu0
        %879 = vmatprep.mubr.f32.mxu0 0.0
        %880 = vmatmul.mubr.f32.gmra.mxu0 %v628
        %v881 = vpop.f32.mrf.mxu0
        %v882 = vadd.f32 0.0, %v881
        %v883 = vpop.f32.mrf.mxu0
        %884 = vdwg.mxu0
        %v885 = vmax.f32 %v786, %v877
        %v886 = vmax.f32 %v787, %v882
        %v887 = vsub.f32 %v786, %v885
        %v888 = vsub.f32 %v787, %v886
        %v889 = vmul.f32 %v887, 1.442695
        %v890 = vpow.pop %v889
        %v891 = vmul.f32 %v888, 1.442695
        %v892 = vpow.pop %v891
        %v893 = vmul.f32 %v800, %v890
        %v894 = vmul.f32 %v801, %v892
        %v895 = vsub.f32 %v877, %v885
        %v896 = vsub.f32 %v882, %v886
        %v897 = vmul.f32 %v895, 1.442695
        %v898 = vpow.pop %v897
        %v899 = vmul.f32 %v896, 1.442695
        %v900 = vpow.pop %v899
        %v901 = vadd.f32 %v893, %v898
        %v902 = vadd.f32 %v894, %v900
        %vm903 = vcmp.eq.s32.totalorder %v620, 2
        %vm904 = vcmp.eq.s32.totalorder %v621, 2
        %v905 = vsel %vm903, %v877, 0.0
        %v906 = vsel %vm904, %v882, 0.0
        %v907 = vadd.f32 %v806, %v905
        %v908 = vadd.f32 %v807, %v906
        %s909 = scalar_lea.vmem [#allocation2], 24
        %v910 = vld [vmem:[%s909] sm:$0xff]
        %911 = vmatprep.subr.mxu0 0.0
        %912 = vmatpush1.msra.mxu0 0.0
        %913 = vmatprep.subr.mxu0 0.0
        %914 = vmatpush1.msra.mxu0 0.0
        %915 = vmatprep.subr.mxu0 0.0
        %916 = vmatpush1.msra.mxu0 0.0
        %917 = vmatprep.subr.mxu0 0.0
        %918 = vmatpush1.msra.mxu0 0.0
        %919 = vmatprep.subr.mxu0 0.0
        %920 = vmatpush1.msra.mxu0 0.0
        %921 = vmatprep.subr.mxu0 0.0
        %922 = vmatpush1.msra.mxu0 0.0
        %923 = vmatprep.subr.mxu0 0.0
        %924 = vmatpush1.msra.mxu0 0.0
        %925 = vmatprep.subr.mxu0 0.0
        %926 = vmatpush1.msra.mxu0 0.0
        %927 = vmatprep.subr.mxu0 0.0
        %928 = vmatpush1.msra.mxu0 0.0
        %929 = vmatprep.subr.mxu0 0.0
        %930 = vmatpush1.msra.mxu0 0.0
        %931 = vmatprep.subr.mxu0 0.0
        %932 = vmatpush1.msra.mxu0 0.0
        %933 = vmatprep.subr.mxu0 0.0
        %934 = vmatpush1.msra.mxu0 0.0
        %935 = vmatprep.subr.mxu0 0.0
        %936 = vmatpush1.msra.mxu0 0.0
        %937 = vmatprep.subr.mxu0 0.0
        %938 = vmatpush1.msra.mxu0 0.0
        %939 = vmatprep.subr.mxu0 0.0
        %940 = vmatpush1.msra.mxu0 0.0
        %941 = vmatprep.subr.mxu0 0.0
        %942 = vmatpush1.msra.mxu0 %v910
        %943 = vmatprep.subr.mxu0 0.0
        %944 = vmatpush2.msra.mxu0 0.0
        %945 = vmatprep.subr.mxu0 0.0
        %946 = vmatpush2.msra.mxu0 0.0
        %947 = vmatprep.subr.mxu0 0.0
        %948 = vmatpush2.msra.mxu0 0.0
        %949 = vmatprep.subr.mxu0 0.0
        %950 = vmatpush2.msra.mxu0 0.0
        %951 = vmatprep.subr.mxu0 0.0
        %952 = vmatpush2.msra.mxu0 0.0
        %953 = vmatprep.subr.mxu0 0.0
        %954 = vmatpush2.msra.mxu0 0.0
        %955 = vmatprep.subr.mxu0 0.0
        %956 = vmatpush2.msra.mxu0 0.0
        %957 = vmatprep.subr.mxu0 0.0
        %958 = vmatpush2.msra.mxu0 0.0
        %959 = vmatprep.subr.mxu0 0.0
        %960 = vmatpush2.msra.mxu0 0.0
        %961 = vmatprep.subr.mxu0 0.0
        %962 = vmatpush2.msra.mxu0 0.0
        %963 = vmatprep.subr.mxu0 0.0
        %964 = vmatpush2.msra.mxu0 0.0
        %965 = vmatprep.subr.mxu0 0.0
        %966 = vmatpush2.msra.mxu0 0.0
        %967 = vmatprep.subr.mxu0 0.0
        %968 = vmatpush2.msra.mxu0 0.0
        %969 = vmatprep.subr.mxu0 0.0
        %970 = vmatpush2.msra.mxu0 0.0
        %971 = vmatprep.subr.mxu0 0.0
        %972 = vmatpush2.msra.mxu0 0.0
        %973 = vmatprep.subr.mxu0 0.0
        %974 = vmatpush2.msra.mxu0 0.0
        %975 = vmatprep.mubr.f32.mxu0 0.0
        %976 = vmatmul.mubr.f32.gmra.mxu0 %v625
        %v977 = vpop.f32.mrf.mxu0
        %v978 = vadd.f32 0.0, %v977
        %v979 = vpop.f32.mrf.mxu0
        %980 = vmatprep.mubr.f32.mxu0 0.0
        %981 = vmatmul.mubr.f32.gmra.mxu0 %v628
        %v982 = vpop.f32.mrf.mxu0
        %v983 = vadd.f32 0.0, %v982
        %v984 = vpop.f32.mrf.mxu0
        %985 = vdwg.mxu0
        %v986 = vmax.f32 %v885, %v978
        %v987 = vmax.f32 %v886, %v983
        %v988 = vsub.f32 %v885, %v986
        %v989 = vsub.f32 %v886, %v987
        %v990 = vmul.f32 %v988, 1.442695
        %v991 = vpow.pop %v990
        %v992 = vmul.f32 %v989, 1.442695
        %v993 = vpow.pop %v992
        %v994 = vmul.f32 %v901, %v991
        %v995 = vmul.f32 %v902, %v993
        %v996 = vsub.f32 %v978, %v986
        %v997 = vsub.f32 %v983, %v987
        %v998 = vmul.f32 %v996, 1.442695
        %v999 = vpow.pop %v998
        %v1000 = vmul.f32 %v997, 1.442695
        %v1001 = vpow.pop %v1000
        %v1002 = vadd.f32 %v994, %v999
        %v1003 = vadd.f32 %v995, %v1001
        %vm1004 = vcmp.eq.s32.totalorder %v620, 3
        %vm1005 = vcmp.eq.s32.totalorder %v621, 3
        %v1006 = vsel %vm1004, %v978, 0.0
        %v1007 = vsel %vm1005, %v983, 0.0
        %v1008 = vadd.f32 %v907, %v1006
        %v1009 = vadd.f32 %v908, %v1007
        %v1010 = vlog2.pop %v1002
        %v1011 = vmul.f32 %v1010, 0.6931472
        %v1012 = vlog2.pop %v1003
        %v1013 = vmul.f32 %v1012, 0.6931472
        %v1014 = vadd.f32 %v986, %v1011
        %v1015 = vadd.f32 %v987, %v1013
        %v1016 = vsub.f32 %v1014, %v1008
        %v1017 = vsub.f32 %v1015, %v1009
        %v1018 = vsel %vm618, %v1016, 0.0
        %v1019 = vsel %vm619, %v1017, 0.0
        %vm1020 = vcmask 130048
        %v1021 = vsel %vm1020, %v1018, 0.0
        %v1022 = vsel %vm1020, %v1019, 0.0
        %v1023 = vadd.f32 %v1021, %v1022
        %1024 = vadd.xlane.f32.xlu0 %v1023
        %v1025 = vpop.xlane.xlu0 %1024
        %v1026 = vrot.slane %v1025, 4
        %v1027 = vadd.f32 %v1025, %v1026
        %v1028 = vrot.slane %v1027, 2
        %v1029 = vadd.f32 %v1027, %v1028
        %v1030 = vrot.slane %v1029, 1
        %v1031 = vadd.f32 %v1029, %v1030
        %s1032 = vtos %v1031
        %v1033 = vstv %s1032
        %v1034 = vadd.f32 %v1033, 0.0
        %s1035 = scalar_lea.vmem [#allocation2], 32
        %v1036 = vld [vmem:[%s1035] sm:$0xff]
        %1037 = vmatprep.subr.mxu0 0.0
        %1038 = vmatpush1.msra.mxu0 0.0
        %1039 = vmatprep.subr.mxu0 0.0
        %1040 = vmatpush1.msra.mxu0 0.0
        %1041 = vmatprep.subr.mxu0 0.0
        %1042 = vmatpush1.msra.mxu0 0.0
        %1043 = vmatprep.subr.mxu0 0.0
        %1044 = vmatpush1.msra.mxu0 0.0
        %1045 = vmatprep.subr.mxu0 0.0
        %1046 = vmatpush1.msra.mxu0 0.0
        %1047 = vmatprep.subr.mxu0 0.0
        %1048 = vmatpush1.msra.mxu0 0.0
        %1049 = vmatprep.subr.mxu0 0.0
        %1050 = vmatpush1.msra.mxu0 0.0
        %1051 = vmatprep.subr.mxu0 0.0
        %1052 = vmatpush1.msra.mxu0 0.0
        %1053 = vmatprep.subr.mxu0 0.0
        %1054 = vmatpush1.msra.mxu0 0.0
        %1055 = vmatprep.subr.mxu0 0.0
        %1056 = vmatpush1.msra.mxu0 0.0
        %1057 = vmatprep.subr.mxu0 0.0
        %1058 = vmatpush1.msra.mxu0 0.0
        %1059 = vmatprep.subr.mxu0 0.0
        %1060 = vmatpush1.msra.mxu0 0.0
        %1061 = vmatprep.subr.mxu0 0.0
        %1062 = vmatpush1.msra.mxu0 0.0
        %1063 = vmatprep.subr.mxu0 0.0
        %1064 = vmatpush1.msra.mxu0 0.0
        %1065 = vmatprep.subr.mxu0 0.0
        %1066 = vmatpush1.msra.mxu0 0.0
        %1067 = vmatprep.subr.mxu0 0.0
        %1068 = vmatpush1.msra.mxu0 %v1036
        %1069 = vmatprep.subr.mxu0 0.0
        %1070 = vmatpush2.msra.mxu0 0.0
        %1071 = vmatprep.subr.mxu0 0.0
        %1072 = vmatpush2.msra.mxu0 0.0
        %1073 = vmatprep.subr.mxu0 0.0
        %1074 = vmatpush2.msra.mxu0 0.0
        %1075 = vmatprep.subr.mxu0 0.0
        %1076 = vmatpush2.msra.mxu0 0.0
        %1077 = vmatprep.subr.mxu0 0.0
        %1078 = vmatpush2.msra.mxu0 0.0
        %1079 = vmatprep.subr.mxu0 0.0
        %1080 = vmatpush2.msra.mxu0 0.0
        %1081 = vmatprep.subr.mxu0 0.0
        %1082 = vmatpush2.msra.mxu0 0.0
        %1083 = vmatprep.subr.mxu0 0.0
        %1084 = vmatpush2.msra.mxu0 0.0
        %1085 = vmatprep.subr.mxu0 0.0
        %1086 = vmatpush2.msra.mxu0 0.0
        %1087 = vmatprep.subr.mxu0 0.0
        %1088 = vmatpush2.msra.mxu0 0.0
        %1089 = vmatprep.subr.mxu0 0.0
        %1090 = vmatpush2.msra.mxu0 0.0
        %1091 = vmatprep.subr.mxu0 0.0
        %1092 = vmatpush2.msra.mxu0 0.0
        %1093 = vmatprep.subr.mxu0 0.0
        %1094 = vmatpush2.msra.mxu0 0.0
        %1095 = vmatprep.subr.mxu0 0.0
        %1096 = vmatpush2.msra.mxu0 0.0
        %1097 = vmatprep.subr.mxu0 0.0
        %1098 = vmatpush2.msra.mxu0 0.0
        %1099 = vmatprep.subr.mxu0 0.0
        %1100 = vmatpush2.msra.mxu0 0.0
        %1101 = vmatprep.mubr.f32.mxu0 0.0
        %1102 = vmatmul.mubr.f32.gmra.mxu0 %v625
        %v1103 = vpop.f32.mrf.mxu0
        %v1104 = vadd.f32 0.0, %v1103
        %v1105 = vpop.f32.mrf.mxu0
        %1106 = vmatprep.mubr.f32.mxu0 0.0
        %1107 = vmatmul.mubr.f32.gmra.mxu0 %v628
        %v1108 = vpop.f32.mrf.mxu0
        %v1109 = vadd.f32 0.0, %v1108
        %v1110 = vpop.f32.mrf.mxu0
        %1111 = vdwg.mxu0
        %v1112 = vsel %vm705, %v1104, 0.0
        %v1113 = vsel %vm706, %v1109, 0.0
        %s1114 = scalar_lea.vmem [#allocation2], 40
        %v1115 = vld [vmem:[%s1114] sm:$0xff]
        %1116 = vmatprep.subr.mxu0 0.0
        %1117 = vmatpush1.msra.mxu0 0.0
        %1118 = vmatprep.subr.mxu0 0.0
        %1119 = vmatpush1.msra.mxu0 0.0
        %1120 = vmatprep.subr.mxu0 0.0
        %1121 = vmatpush1.msra.mxu0 0.0
        %1122 = vmatprep.subr.mxu0 0.0
        %1123 = vmatpush1.msra.mxu0 0.0
        %1124 = vmatprep.subr.mxu0 0.0
        %1125 = vmatpush1.msra.mxu0 0.0
        %1126 = vmatprep.subr.mxu0 0.0
        %1127 = vmatpush1.msra.mxu0 0.0
        %1128 = vmatprep.subr.mxu0 0.0
        %1129 = vmatpush1.msra.mxu0 0.0
        %1130 = vmatprep.subr.mxu0 0.0
        %1131 = vmatpush1.msra.mxu0 0.0
        %1132 = vmatprep.subr.mxu0 0.0
        %1133 = vmatpush1.msra.mxu0 0.0
        %1134 = vmatprep.subr.mxu0 0.0
        %1135 = vmatpush1.msra.mxu0 0.0
        %1136 = vmatprep.subr.mxu0 0.0
        %1137 = vmatpush1.msra.mxu0 0.0
        %1138 = vmatprep.subr.mxu0 0.0
        %1139 = vmatpush1.msra.mxu0 0.0
        %1140 = vmatprep.subr.mxu0 0.0
        %1141 = vmatpush1.msra.mxu0 0.0
        %1142 = vmatprep.subr.mxu0 0.0
        %1143 = vmatpush1.msra.mxu0 0.0
        %1144 = vmatprep.subr.mxu0 0.0
        %1145 = vmatpush1.msra.mxu0 0.0
        %1146 = vmatprep.subr.mxu0 0.0
        %1147 = vmatpush1.msra.mxu0 %v1115
        %1148 = vmatprep.subr.mxu0 0.0
        %1149 = vmatpush2.msra.mxu0 0.0
        %1150 = vmatprep.subr.mxu0 0.0
        %1151 = vmatpush2.msra.mxu0 0.0
        %1152 = vmatprep.subr.mxu0 0.0
        %1153 = vmatpush2.msra.mxu0 0.0
        %1154 = vmatprep.subr.mxu0 0.0
        %1155 = vmatpush2.msra.mxu0 0.0
        %1156 = vmatprep.subr.mxu0 0.0
        %1157 = vmatpush2.msra.mxu0 0.0
        %1158 = vmatprep.subr.mxu0 0.0
        %1159 = vmatpush2.msra.mxu0 0.0
        %1160 = vmatprep.subr.mxu0 0.0
        %1161 = vmatpush2.msra.mxu0 0.0
        %1162 = vmatprep.subr.mxu0 0.0
        %1163 = vmatpush2.msra.mxu0 0.0
        %1164 = vmatprep.subr.mxu0 0.0
        %1165 = vmatpush2.msra.mxu0 0.0
        %1166 = vmatprep.subr.mxu0 0.0
        %1167 = vmatpush2.msra.mxu0 0.0
        %1168 = vmatprep.subr.mxu0 0.0
        %1169 = vmatpush2.msra.mxu0 0.0
        %1170 = vmatprep.subr.mxu0 0.0
        %1171 = vmatpush2.msra.mxu0 0.0
        %1172 = vmatprep.subr.mxu0 0.0
        %1173 = vmatpush2.msra.mxu0 0.0
        %1174 = vmatprep.subr.mxu0 0.0
        %1175 = vmatpush2.msra.mxu0 0.0
        %1176 = vmatprep.subr.mxu0 0.0
        %1177 = vmatpush2.msra.mxu0 0.0
        %1178 = vmatprep.subr.mxu0 0.0
        %1179 = vmatpush2.msra.mxu0 0.0
        %1180 = vmatprep.mubr.f32.mxu0 0.0
        %1181 = vmatmul.mubr.f32.gmra.mxu0 %v625
        %v1182 = vpop.f32.mrf.mxu0
        %v1183 = vadd.f32 0.0, %v1182
        %v1184 = vpop.f32.mrf.mxu0
        %1185 = vmatprep.mubr.f32.mxu0 0.0
        %1186 = vmatmul.mubr.f32.gmra.mxu0 %v628
        %v1187 = vpop.f32.mrf.mxu0
        %v1188 = vadd.f32 0.0, %v1187
        %v1189 = vpop.f32.mrf.mxu0
        %1190 = vdwg.mxu0
        %v1191 = vmax.f32 %v1104, %v1183
        %v1192 = vmax.f32 %v1109, %v1188
        %v1193 = vsub.f32 %v1104, %v1191
        %v1194 = vsub.f32 %v1109, %v1192
        %v1195 = vmul.f32 %v1193, 1.442695
        %v1196 = vpow.pop %v1195
        %v1197 = vmul.f32 %v1194, 1.442695
        %v1198 = vpow.pop %v1197
        %v1199 = vsub.f32 %v1183, %v1191
        %v1200 = vsub.f32 %v1188, %v1192
        %v1201 = vmul.f32 %v1199, 1.442695
        %v1202 = vpow.pop %v1201
        %v1203 = vmul.f32 %v1200, 1.442695
        %v1204 = vpow.pop %v1203
        %v1205 = vadd.f32 %v1196, %v1202
        %v1206 = vadd.f32 %v1198, %v1204
        %v1207 = vsel %vm802, %v1183, 0.0
        %v1208 = vsel %vm803, %v1188, 0.0
        %v1209 = vadd.f32 %v1112, %v1207
        %v1210 = vadd.f32 %v1113, %v1208
        %s1211 = scalar_lea.vmem [#allocation2], 48
        %v1212 = vld [vmem:[%s1211] sm:$0xff]
        %1213 = vmatprep.subr.mxu0 0.0
        %1214 = vmatpush1.msra.mxu0 0.0
        %1215 = vmatprep.subr.mxu0 0.0
        %1216 = vmatpush1.msra.mxu0 0.0
        %1217 = vmatprep.subr.mxu0 0.0
        %1218 = vmatpush1.msra.mxu0 0.0
        %1219 = vmatprep.subr.mxu0 0.0
        %1220 = vmatpush1.msra.mxu0 0.0
        %1221 = vmatprep.subr.mxu0 0.0
        %1222 = vmatpush1.msra.mxu0 0.0
        %1223 = vmatprep.subr.mxu0 0.0
        %1224 = vmatpush1.msra.mxu0 0.0
        %1225 = vmatprep.subr.mxu0 0.0
        %1226 = vmatpush1.msra.mxu0 0.0
        %1227 = vmatprep.subr.mxu0 0.0
        %1228 = vmatpush1.msra.mxu0 0.0
        %1229 = vmatprep.subr.mxu0 0.0
        %1230 = vmatpush1.msra.mxu0 0.0
        %1231 = vmatprep.subr.mxu0 0.0
        %1232 = vmatpush1.msra.mxu0 0.0
        %1233 = vmatprep.subr.mxu0 0.0
        %1234 = vmatpush1.msra.mxu0 0.0
        %1235 = vmatprep.subr.mxu0 0.0
        %1236 = vmatpush1.msra.mxu0 0.0
        %1237 = vmatprep.subr.mxu0 0.0
        %1238 = vmatpush1.msra.mxu0 0.0
        %1239 = vmatprep.subr.mxu0 0.0
        %1240 = vmatpush1.msra.mxu0 0.0
        %1241 = vmatprep.subr.mxu0 0.0
        %1242 = vmatpush1.msra.mxu0 0.0
        %1243 = vmatprep.subr.mxu0 0.0
        %1244 = vmatpush1.msra.mxu0 %v1212
        %1245 = vmatprep.subr.mxu0 0.0
        %1246 = vmatpush2.msra.mxu0 0.0
        %1247 = vmatprep.subr.mxu0 0.0
        %1248 = vmatpush2.msra.mxu0 0.0
        %1249 = vmatprep.subr.mxu0 0.0
        %1250 = vmatpush2.msra.mxu0 0.0
        %1251 = vmatprep.subr.mxu0 0.0
        %1252 = vmatpush2.msra.mxu0 0.0
        %1253 = vmatprep.subr.mxu0 0.0
        %1254 = vmatpush2.msra.mxu0 0.0
        %1255 = vmatprep.subr.mxu0 0.0
        %1256 = vmatpush2.msra.mxu0 0.0
        %1257 = vmatprep.subr.mxu0 0.0
        %1258 = vmatpush2.msra.mxu0 0.0
        %1259 = vmatprep.subr.mxu0 0.0
        %1260 = vmatpush2.msra.mxu0 0.0
        %1261 = vmatprep.subr.mxu0 0.0
        %1262 = vmatpush2.msra.mxu0 0.0
        %1263 = vmatprep.subr.mxu0 0.0
        %1264 = vmatpush2.msra.mxu0 0.0
        %1265 = vmatprep.subr.mxu0 0.0
        %1266 = vmatpush2.msra.mxu0 0.0
        %1267 = vmatprep.subr.mxu0 0.0
        %1268 = vmatpush2.msra.mxu0 0.0
        %1269 = vmatprep.subr.mxu0 0.0
        %1270 = vmatpush2.msra.mxu0 0.0
        %1271 = vmatprep.subr.mxu0 0.0
        %1272 = vmatpush2.msra.mxu0 0.0
        %1273 = vmatprep.subr.mxu0 0.0
        %1274 = vmatpush2.msra.mxu0 0.0
        %1275 = vmatprep.subr.mxu0 0.0
        %1276 = vmatpush2.msra.mxu0 0.0
        %1277 = vmatprep.mubr.f32.mxu0 0.0
        %1278 = vmatmul.mubr.f32.gmra.mxu0 %v625
        %v1279 = vpop.f32.mrf.mxu0
        %v1280 = vadd.f32 0.0, %v1279
        %v1281 = vpop.f32.mrf.mxu0
        %1282 = vmatprep.mubr.f32.mxu0 0.0
        %1283 = vmatmul.mubr.f32.gmra.mxu0 %v628
        %v1284 = vpop.f32.mrf.mxu0
        %v1285 = vadd.f32 0.0, %v1284
        %v1286 = vpop.f32.mrf.mxu0
        %1287 = vdwg.mxu0
        %v1288 = vmax.f32 %v1191, %v1280
        %v1289 = vmax.f32 %v1192, %v1285
        %v1290 = vsub.f32 %v1191, %v1288
        %v1291 = vsub.f32 %v1192, %v1289
        %v1292 = vmul.f32 %v1290, 1.442695
        %v1293 = vpow.pop %v1292
        %v1294 = vmul.f32 %v1291, 1.442695
        %v1295 = vpow.pop %v1294
        %v1296 = vmul.f32 %v1205, %v1293
        %v1297 = vmul.f32 %v1206, %v1295
        %v1298 = vsub.f32 %v1280, %v1288
        %v1299 = vsub.f32 %v1285, %v1289
        %v1300 = vmul.f32 %v1298, 1.442695
        %v1301 = vpow.pop %v1300
        %v1302 = vmul.f32 %v1299, 1.442695
        %v1303 = vpow.pop %v1302
        %v1304 = vadd.f32 %v1296, %v1301
        %v1305 = vadd.f32 %v1297, %v1303
        %v1306 = vsel %vm903, %v1280, 0.0
        %v1307 = vsel %vm904, %v1285, 0.0
        %v1308 = vadd.f32 %v1209, %v1306
        %v1309 = vadd.f32 %v1210, %v1307
        %s1310 = scalar_lea.vmem [#allocation2], 56
        %v1311 = vld [vmem:[%s1310] sm:$0xff]
        %1312 = vmatprep.subr.mxu0 0.0
        %1313 = vmatpush1.msra.mxu0 0.0
        %1314 = vmatprep.subr.mxu0 0.0
        %1315 = vmatpush1.msra.mxu0 0.0
        %1316 = vmatprep.subr.mxu0 0.0
        %1317 = vmatpush1.msra.mxu0 0.0
        %1318 = vmatprep.subr.mxu0 0.0
        %1319 = vmatpush1.msra.mxu0 0.0
        %1320 = vmatprep.subr.mxu0 0.0
        %1321 = vmatpush1.msra.mxu0 0.0
        %1322 = vmatprep.subr.mxu0 0.0
        %1323 = vmatpush1.msra.mxu0 0.0
        %1324 = vmatprep.subr.mxu0 0.0
        %1325 = vmatpush1.msra.mxu0 0.0
        %1326 = vmatprep.subr.mxu0 0.0
        %1327 = vmatpush1.msra.mxu0 0.0
        %1328 = vmatprep.subr.mxu0 0.0
        %1329 = vmatpush1.msra.mxu0 0.0
        %1330 = vmatprep.subr.mxu0 0.0
        %1331 = vmatpush1.msra.mxu0 0.0
        %1332 = vmatprep.subr.mxu0 0.0
        %1333 = vmatpush1.msra.mxu0 0.0
        %1334 = vmatprep.subr.mxu0 0.0
        %1335 = vmatpush1.msra.mxu0 0.0
        %1336 = vmatprep.subr.mxu0 0.0
        %1337 = vmatpush1.msra.mxu0 0.0
        %1338 = vmatprep.subr.mxu0 0.0
        %1339 = vmatpush1.msra.mxu0 0.0
        %1340 = vmatprep.subr.mxu0 0.0
        %1341 = vmatpush1.msra.mxu0 0.0
        %1342 = vmatprep.subr.mxu0 0.0
        %1343 = vmatpush1.msra.mxu0 %v1311
        %1344 = vmatprep.subr.mxu0 0.0
        %1345 = vmatpush2.msra.mxu0 0.0
        %1346 = vmatprep.subr.mxu0 0.0
        %1347 = vmatpush2.msra.mxu0 0.0
        %1348 = vmatprep.subr.mxu0 0.0
        %1349 = vmatpush2.msra.mxu0 0.0
        %1350 = vmatprep.subr.mxu0 0.0
        %1351 = vmatpush2.msra.mxu0 0.0
        %1352 = vmatprep.subr.mxu0 0.0
        %1353 = vmatpush2.msra.mxu0 0.0
        %1354 = vmatprep.subr.mxu0 0.0
        %1355 = vmatpush2.msra.mxu0 0.0
        %1356 = vmatprep.subr.mxu0 0.0
        %1357 = vmatpush2.msra.mxu0 0.0
        %1358 = vmatprep.subr.mxu0 0.0
        %1359 = vmatpush2.msra.mxu0 0.0
        %1360 = vmatprep.subr.mxu0 0.0
        %1361 = vmatpush2.msra.mxu0 0.0
        %1362 = vmatprep.subr.mxu0 0.0
        %1363 = vmatpush2.msra.mxu0 0.0
        %1364 = vmatprep.subr.mxu0 0.0
        %1365 = vmatpush2.msra.mxu0 0.0
        %1366 = vmatprep.subr.mxu0 0.0
        %1367 = vmatpush2.msra.mxu0 0.0
        %1368 = vmatprep.subr.mxu0 0.0
        %1369 = vmatpush2.msra.mxu0 0.0
        %1370 = vmatprep.subr.mxu0 0.0
        %1371 = vmatpush2.msra.mxu0 0.0
        %1372 = vmatprep.subr.mxu0 0.0
        %1373 = vmatpush2.msra.mxu0 0.0
        %1374 = vmatprep.subr.mxu0 0.0
        %1375 = vmatpush2.msra.mxu0 0.0
        %1376 = vmatprep.mubr.f32.mxu0 0.0
        %1377 = vmatmul.mubr.f32.gmra.mxu0 %v625
        %v1378 = vpop.f32.mrf.mxu0
        %v1379 = vadd.f32 0.0, %v1378
        %v1380 = vpop.f32.mrf.mxu0
        %1381 = vmatprep.mubr.f32.mxu0 0.0
        %1382 = vmatmul.mubr.f32.gmra.mxu0 %v628
        %v1383 = vpop.f32.mrf.mxu0
        %v1384 = vadd.f32 0.0, %v1383
        %v1385 = vpop.f32.mrf.mxu0
        %1386 = vdwg.mxu0
        %v1387 = vmax.f32 %v1288, %v1379
        %v1388 = vmax.f32 %v1289, %v1384
        %v1389 = vsub.f32 %v1288, %v1387
        %v1390 = vsub.f32 %v1289, %v1388
        %v1391 = vmul.f32 %v1389, 1.442695
        %v1392 = vpow.pop %v1391
        %v1393 = vmul.f32 %v1390, 1.442695
        %v1394 = vpow.pop %v1393
        %v1395 = vmul.f32 %v1304, %v1392
        %v1396 = vmul.f32 %v1305, %v1394
        %v1397 = vsub.f32 %v1379, %v1387
        %v1398 = vsub.f32 %v1384, %v1388
        %v1399 = vmul.f32 %v1397, 1.442695
        %v1400 = vpow.pop %v1399
        %v1401 = vmul.f32 %v1398, 1.442695
        %v1402 = vpow.pop %v1401
        %v1403 = vadd.f32 %v1395, %v1400
        %v1404 = vadd.f32 %v1396, %v1402
        %v1405 = vsel %vm1004, %v1379, 0.0
        %v1406 = vsel %vm1005, %v1384, 0.0
        %v1407 = vadd.f32 %v1308, %v1405
        %v1408 = vadd.f32 %v1309, %v1406
        %v1409 = vlog2.pop %v1403
        %v1410 = vmul.f32 %v1409, 0.6931472
        %v1411 = vlog2.pop %v1404
        %v1412 = vmul.f32 %v1411, 0.6931472
        %v1413 = vadd.f32 %v1387, %v1410
        %v1414 = vadd.f32 %v1388, %v1412
        %v1415 = vsub.f32 %v1413, %v1407
        %v1416 = vsub.f32 %v1414, %v1408
        %v1417 = vsel %vm618, %v1415, 0.0
        %v1418 = vsel %vm619, %v1416, 0.0
        %v1419 = vsel %vm1020, %v1417, 0.0
        %v1420 = vsel %vm1020, %v1418, 0.0
        %v1421 = vadd.f32 %v1419, %v1420
        %1422 = vadd.xlane.f32.xlu0 %v1421
        %v1423 = vpop.xlane.xlu0 %1422
        %v1424 = vrot.slane %v1423, 4
        %v1425 = vadd.f32 %v1423, %v1424
        %v1426 = vrot.slane %v1425, 2
        %v1427 = vadd.f32 %v1425, %v1426
        %v1428 = vrot.slane %v1427, 1
        %v1429 = vadd.f32 %v1427, %v1428
        %s1430 = vtos %v1429
        %v1431 = vstv %s1430
        %v1432 = vmul.f32 %v1431, 0.4
        %v1433 = vadd.f32 %v1034, %v1432
        %v1434 = vld [vmem:[%s389] sm:$0x1]
        %v1435 = vadd.f32 %v1434, %v1433
        %vm1436 = vcmask 0
        %1437 = vst.msk [vmem:[%s389] sm:$0x1] %vm1436, %v1435
        %v1438 = vld [vmem:[%s392] sm:$0x1]
        %v1439 = vsel %vm618, 1, 0
        %v1440 = vsel %vm619, 1, 0
        %v1441 = vcvt.s32.f32 %v1439
        %v1442 = vcvt.s32.f32 %v1440
        %v1443 = vsel %vm1020, %v1441, 0.0
        %v1444 = vsel %vm1020, %v1442, 0.0
        %v1445 = vadd.f32 %v1443, %v1444
        %1446 = vadd.xlane.f32.xlu0 %v1445
        %v1447 = vpop.xlane.xlu0 %1446
        %v1448 = vrot.slane %v1447, 4
        %v1449 = vadd.f32 %v1447, %v1448
        %v1450 = vrot.slane %v1449, 2
        %v1451 = vadd.f32 %v1449, %v1450
        %v1452 = vrot.slane %v1451, 1
        %v1453 = vadd.f32 %v1451, %v1452
        %s1454 = vtos %v1453
        %v1455 = vstv %s1454
        %v1456 = vadd.f32 %v1438, %v1455
        %1457 = vst.msk [vmem:[%s392] sm:$0x1] %vm1436, %v1456
        %p1458 = scmp.lt.s32.totalorder %s28, 1
        %s1459 = scalar_select %p1458, %s28, 1
        %s1460 = scalar_lea.vmem %s5, %s1459
        %p1461 = scmp.lt.s32.totalorder %s28, 1
        %s1462 = scalar_select %p1461, %s28, 1
        %s1463 = scalar_lea.vmem %s6, %s1462
        // Predicated region
        $region57: #{tpu_custom_call.1} parent=39 // pred_check
          %p1464 = pneg %p181
        $region58: #{tpu_custom_call.1} parent=39 // pred_check_branch
          %1466 = sbr.rel (%p1464) target = $region60
        $region59: #{tpu_custom_call.1} parent=39 // pred_region
          _
        $region60: #{tpu_custom_call.1} parent=39 // pred_fallthru
          _
        // Predicated region
        $region61: #{tpu_custom_call.1} parent=39 // pred_check
          %p1467 = pneg %p207
        $region62: #{tpu_custom_call.1} parent=39 // pred_check_branch
          %1469 = sbr.rel (%p1467) target = $region64
        $region63: #{tpu_custom_call.1} parent=39 // pred_region
          _
        $region64: #{tpu_custom_call.1} parent=39 // pred_fallthru
          _
      $region40: #{tpu_custom_call.1} parent=5 // pred_fallthru
        _
      %p1470 = scmp.le.s32.totalorder 2, %s19
      // Predicated region
      $region65: #{tpu_custom_call.1} parent=5 // pred_check
        %p1471 = pneg %p1470
      $region66: #{tpu_custom_call.1} parent=5 // pred_check_branch
        %1473 = sbr.rel (%p1471) target = $region68
      $region67: #{tpu_custom_call.1} parent=5 // pred_region
        %s1474 = ssub.s32 %s19, 2
        // Predicated region
        $region69: #{tpu_custom_call.1} parent=67 // pred_check
          %p1475 = pneg %p187
        $region70: #{tpu_custom_call.1} parent=67 // pred_check_branch
          %1477 = sbr.rel (%p1475) target = $region72
        $region71: #{tpu_custom_call.1} parent=67 // pred_region
          %p1478 = scmp.lt.s32.totalorder %s30, 1
          %s1479 = scalar_select %p1478, %s30, 1
          %s1480 = scalar_lea.vmem %s5, %s1479
        $region72: #{tpu_custom_call.1} parent=67 // pred_fallthru
          _
        // Predicated region
        $region73: #{tpu_custom_call.1} parent=67 // pred_check
          %p1481 = pneg %p213
        $region74: #{tpu_custom_call.1} parent=67 // pred_check_branch
          %1483 = sbr.rel (%p1481) target = $region76
        $region75: #{tpu_custom_call.1} parent=67 // pred_region
          %p1484 = scmp.lt.s32.totalorder %s30, 1
          %s1485 = scalar_select %p1484, %s30, 1
          %s1486 = scalar_lea.vmem %s6, %s1485
        $region76: #{tpu_custom_call.1} parent=67 // pred_fallthru
          _
      $region68: #{tpu_custom_call.1} parent=5 // pred_fallthru
        _
    $region6: #{tpu_custom_call.1} parent=1 // loop_footer
      %s23 = sadd.s32 1, %s19
    $region7: #{tpu_custom_call.1} parent=1 // loop_footer_branch
      %18 = sbr.rel target = $region3
    $region8: #{tpu_custom_call.1} parent=1 // loop_exit
      _
    %1487 = vsyncpa [#allocation4], 1
    %s1488 = scalar_lea.sflag [#allocation4], 1
    %1489 = vsyncpa %s1488, 1
    %1490 = vsyncpa [#allocation6], 1
    %s1491 = scalar_lea.sflag [#allocation6], 1
    %1492 = vsyncpa %s1491, 1

</llo_original>
